<compile_context>
chip_gen: v6e
topology: v6e:2x2x1
jax: 0.10.0
libtpu: 0.0.40
codegen_flags: <defaults>
</compile_context>

<pallas_src>
import functools

import jax
import jax.numpy as jnp
import numpy as np
from jax.experimental import pallas as pl
from jax.experimental.pallas import tpu as pltpu


def _largest_chunk(total_rows, max_rows):
    """Largest multiple-of-8 divisor of total_rows that is <= max_rows."""
    best = None
    limit = min(total_rows, max_rows)
    for p in range(8, limit + 1, 8):
        if total_rows % p == 0:
            best = p
    # Fallback: a full-extent block is always legal (block dim == array dim).
    return best if best is not None else total_rows


def _tsn_kernel(x_ref, w1_ref, b1_ref, wfc_ref, bfc_ref, o_ref, acc_ref,
                *, channels, inv_total):
    """One grid step = one (video n, spatial chunk) slab.

    x_ref   : (1, P, C)   chunk of a video's T*H*W pixels (channels last)
    w1_ref  : (C, F)      synthetic backbone pointwise-conv weight
    b1_ref  : (1, F)      backbone bias
    wfc_ref : (F, Kp)     new_fc weight, zero-padded to Kp = ceil(K/128)*128
    bfc_ref : (1, Kp)     new_fc bias, zero-padded
    o_ref   : (1, 1, Kp)  per-video logits, written once at the last chunk
    acc_ref : (1, F)      VMEM f32 accumulator: sum over T*H*W of ReLU(conv)
    """
    ci = pl.program_id(1)
    n_chunks = pl.num_programs(1)

    @pl.when(ci == 0)
    def _init():
        acc_ref[...] = jnp.zeros_like(acc_ref)

    x = x_ref[0]            # (P, C)
    w1 = w1_ref[...]        # (C, F)

    # Pointwise conv.  For tiny C (RGB) use unrolled VPU broadcast-FMAs so the
    # MXU is not fed a K=3 contraction; fall back to a real matmul otherwise.
    if channels <= 8:
        h = x[:, 0:1] * w1[0:1, :]
        for c in range(1, channels):
            h = h + x[:, c:c + 1] * w1[c:c + 1, :]
    else:
        h = jnp.dot(x, w1, preferred_element_type=jnp.float32)
    h = jnp.maximum(h + b1_ref[...], 0.0)                      # (P, F)

    # Partial global-average-pool over T*H*W, accumulated in the VMEM scratch
    # (never round-trips through the output writeback path).
    acc_ref[...] += jnp.sum(h, axis=0, keepdims=True)          # (1, F)

    @pl.when(ci == n_chunks - 1)
    def _finalize():
        # AdaptiveAvgPool2d(1) + avg consensus over segments == mean over T*H*W.
        pooled = acc_ref[...] * inv_total                       # (1, F)
        # new_fc (Dropout is identity in eval; before_softmax -> no softmax).
        logits = jnp.dot(pooled, wfc_ref[...],
                         preferred_element_type=jnp.float32) + bfc_ref[...]
        o_ref[...] = logits[None].astype(o_ref.dtype)           # (1, 1, Kp)


def tsn_forward(x_nchw, w1, b1, wfc, bfc, *, num_segments, max_chunk_rows=512):
    """x_nchw: (N*T, C, H, W) float32.  Returns (N, num_class)."""
    NT, C, H, W = x_nchw.shape
    assert NT % num_segments == 0
    N = NT // num_segments
    T = num_segments
    THW = T * H * W
    F = w1.shape[1]
    K = wfc.shape[1]
    Kp = pl.cdiv(K, 128) * 128          # lane-dense output width

    # TODO(synk): STMEM module has no provided definition; treated as identity.
    # NCHW -> NHWC -> (N, T*H*W, C): a video's pixels as one slab.
    x = jnp.transpose(x_nchw, (0, 2, 3, 1)).reshape(N, THW, C)

    # Pad the tiny num_class axis so the kernel output is lane-dense.
    wfc_p = jnp.pad(wfc, ((0, 0), (0, Kp - K)))
    bfc_p = jnp.pad(bfc, ((0, 0), (0, Kp - K)))

    # Spatial chunking keeps the (P, C) block small in VMEM at real TSN sizes.
    P = _largest_chunk(THW, max_chunk_rows)
    n_chunks = THW // P

    kernel = functools.partial(_tsn_kernel, channels=C, inv_total=1.0 / THW)

    out = pl.pallas_call(
        kernel,
        out_shape=jax.ShapeDtypeStruct((N, 1, Kp), jnp.float32),
        grid=(N, n_chunks),
        in_specs=[
            pl.BlockSpec((1, P, C), lambda n, c: (n, c, 0)),
            pl.BlockSpec((C, F), lambda n, c: (0, 0)),
            pl.BlockSpec((1, F), lambda n, c: (0, 0)),
            pl.BlockSpec((F, Kp), lambda n, c: (0, 0)),
            pl.BlockSpec((1, Kp), lambda n, c: (0, 0)),
        ],
        out_specs=pl.BlockSpec((1, 1, Kp), lambda n, c: (n, 0, 0)),
        scratch_shapes=[pltpu.VMEM((1, F), jnp.float32)],
        compiler_params=pltpu.CompilerParams(
            dimension_semantics=("parallel", "arbitrary")),
    )(x, w1, b1, wfc_p, bfc_p)

    # consensus keeps dim=1 (keepdim) then the module does .squeeze(1);
    # slice off the lane padding of num_class.
    return out[:, 0, :K]


def reference_forward(x_nchw, w1, b1, wfc, bfc, *, num_segments):
    NT, C, H, W = x_nchw.shape
    N = NT // num_segments
    x = jnp.transpose(x_nchw, (0, 2, 3, 1)).reshape(N, num_segments, H * W, C)
    h = jnp.maximum(jnp.einsum('ntpc,cf->ntpf', x, w1) + b1[0], 0.0)
    pooled = h.mean(axis=2)                         # per-frame global avg pool
    logits = jnp.einsum('ntf,fk->ntk', pooled, wfc) + bfc[0]
    return logits.mean(axis=1)                      # avg consensus over segments


if __name__ == "__main__":
    # Small, TSN-consistent shapes.
    N = 2                 # videos (batch)
    T = 4                 # num_segments
    C = 3                 # RGB modality, new_length = 1
    H = W = 16            # img_size (scaled down)
    F = 128               # synthetic backbone feature_dim (resnet101 uses 2048)
    K = 10                # num_class

    key = jax.random.PRNGKey(0)
    k_x, k_w1, k_b1, k_wfc = jax.random.split(key, 4)

    x = jax.random.normal(k_x, (N * T, C, H, W), dtype=jnp.float32)

    # Synthetic backbone parameters (deterministic).
    w1 = jax.random.normal(k_w1, (C, F), dtype=jnp.float32) * 0.05
    b1 = jax.random.normal(k_b1, (1, F), dtype=jnp.float32) * 0.01

    # new_fc init per module: normal_(weight, 0, 0.001), constant_(bias, 0).
    wfc = jax.random.normal(k_wfc, (F, K), dtype=jnp.float32) * 0.001
    bfc = jnp.zeros((1, K), dtype=jnp.float32)

    out = tsn_forward(x, w1, b1, wfc, bfc, num_segments=T)
    out = jax.block_until_ready(out)

    ref = reference_forward(x, w1, b1, wfc, bfc, num_segments=T)
    np.testing.assert_allclose(np.asarray(out), np.asarray(ref),
                               rtol=1e-5, atol=1e-5)
    assert out.shape == (N, K)
    print("KERNEL_OK")
</pallas_src>

<mosaic_0001>
module attributes {stable_mosaic.version = 11 : i64} {
  func.func @_tsn_kernel(%arg0: i32, %arg1: i32, %arg2: memref<1x512x3xf32, #tpu.memory_space<vmem>>, %arg3: memref<3x128xf32, #tpu.memory_space<vmem>>, %arg4: memref<1x128xf32, #tpu.memory_space<vmem>>, %arg5: memref<128x128xf32, #tpu.memory_space<vmem>>, %arg6: memref<1x128xf32, #tpu.memory_space<vmem>>, %arg7: memref<1x1x128xf32, #tpu.memory_space<vmem>>, %arg8: memref<1x128xf32, #tpu.memory_space<vmem>>) attributes {dimension_semantics = [#tpu.dimension_semantics<parallel>, #tpu.dimension_semantics<arbitrary>], iteration_bounds = array<i64: 2, 2>, scalar_prefetch = 0 : i64, scratch_operands = 1 : i64, tpu.core_type = #tpu.core_type<tc>, window_params = [{transform_indices = @transform_0, window_bounds = array<i64: 1, 512, 3>}, {pipeline_mode = #tpu.pipeline_mode<synchronous>, transform_indices = @transform_1, window_bounds = array<i64: 3, 128>}, {pipeline_mode = #tpu.pipeline_mode<synchronous>, transform_indices = @transform_2, window_bounds = array<i64: 1, 128>}, {pipeline_mode = #tpu.pipeline_mode<synchronous>, transform_indices = @transform_3, window_bounds = array<i64: 128, 128>}, {pipeline_mode = #tpu.pipeline_mode<synchronous>, transform_indices = @transform_4, window_bounds = array<i64: 1, 128>}, {transform_indices = @transform_5, window_bounds = array<i64: 1, 1, 128>}]} {
    %c0_i32 = arith.constant 0 : i32
    %0 = arith.cmpi eq, %arg1, %c0_i32 : i32
    %1 = arith.extui %0 : i1 to i32
    %c0_i32_0 = arith.constant 0 : i32
    %2 = arith.cmpi ne, %1, %c0_i32_0 : i32
    scf.if %2 {
      %cst_13 = arith.constant 0.000000e+00 : f32
      %36 = vector.broadcast %cst_13 : f32 to vector<1x128xf32>
      %c0_14 = arith.constant 0 : index
      %c0_15 = arith.constant 0 : index
      %37 = vector.load %arg8[%c0_14, %c0_15] : memref<1x128xf32, #tpu.memory_space<vmem>>, vector<1x128xf32>
      tpu.vector_store %arg8[%c0_14, %c0_15], %36 {strides = array<i32>} : memref<1x128xf32, #tpu.memory_space<vmem>>, vector<1x128xf32>,
    } else {
    }
    %c0 = arith.constant 0 : index
    %c0_1 = arith.constant 0 : index
    %c0_2 = arith.constant 0 : index
    %3 = vector.load %arg2[%c0, %c0_1, %c0_2] : memref<1x512x3xf32, #tpu.memory_space<vmem>>, vector<1x512x3xf32>
    %4 = vector.shape_cast %3 : vector<1x512x3xf32> to vector<512x3xf32>
    %c0_3 = arith.constant 0 : index
    %c0_4 = arith.constant 0 : index
    %5 = vector.load %arg3[%c0_3, %c0_4] : memref<3x128xf32, #tpu.memory_space<vmem>>, vector<3x128xf32>
    %6 = vector.extract_strided_slice %4 {offsets = [0, 0], sizes = [512, 1], strides = [1, 1]} : vector<512x3xf32> to vector<512x1xf32>
    %7 = vector.extract_strided_slice %5 {offsets = [0, 0], sizes = [1, 128], strides = [1, 1]} : vector<3x128xf32> to vector<1x128xf32>
    %8 = vector.broadcast %6 : vector<512x1xf32> to vector<512x128xf32>
    %9 = vector.broadcast %7 : vector<1x128xf32> to vector<512x128xf32>
    %10 = arith.mulf %8, %9 : vector<512x128xf32>
    %11 = vector.extract_strided_slice %4 {offsets = [0, 1], sizes = [512, 1], strides = [1, 1]} : vector<512x3xf32> to vector<512x1xf32>
    %12 = vector.extract_strided_slice %5 {offsets = [1, 0], sizes = [1, 128], strides = [1, 1]} : vector<3x128xf32> to vector<1x128xf32>
    %13 = vector.broadcast %11 : vector<512x1xf32> to vector<512x128xf32>
    %14 = vector.broadcast %12 : vector<1x128xf32> to vector<512x128xf32>
    %15 = arith.mulf %13, %14 : vector<512x128xf32>
    %16 = arith.addf %10, %15 : vector<512x128xf32>
    %17 = vector.extract_strided_slice %4 {offsets = [0, 2], sizes = [512, 1], strides = [1, 1]} : vector<512x3xf32> to vector<512x1xf32>
    %18 = vector.extract_strided_slice %5 {offsets = [2, 0], sizes = [1, 128], strides = [1, 1]} : vector<3x128xf32> to vector<1x128xf32>
    %19 = vector.broadcast %17 : vector<512x1xf32> to vector<512x128xf32>
    %20 = vector.broadcast %18 : vector<1x128xf32> to vector<512x128xf32>
    %21 = arith.mulf %19, %20 : vector<512x128xf32>
    %22 = arith.addf %16, %21 : vector<512x128xf32>
    %c0_5 = arith.constant 0 : index
    %c0_6 = arith.constant 0 : index
    %23 = vector.load %arg4[%c0_5, %c0_6] : memref<1x128xf32, #tpu.memory_space<vmem>>, vector<1x128xf32>
    %24 = vector.broadcast %23 : vector<1x128xf32> to vector<512x128xf32>
    %25 = arith.addf %22, %24 : vector<512x128xf32>
    %cst = arith.constant 0.000000e+00 : f32
    %26 = vector.broadcast %cst : f32 to vector<512x128xf32>
    %27 = arith.maximumf %25, %26 : vector<512x128xf32>
    %c0_7 = arith.constant 0 : index
    %c0_8 = arith.constant 0 : index
    %28 = vector.load %arg8[%c0_7, %c0_8] : memref<1x128xf32, #tpu.memory_space<vmem>>, vector<1x128xf32>
    %cst_9 = arith.constant dense<0.000000e+00> : vector<128xf32>
    %29 = vector.multi_reduction <add>, %27, %cst_9 [0] : vector<512x128xf32> to vector<128xf32>
    %30 = vector.shape_cast %29 : vector<128xf32> to vector<1x128xf32>
    %31 = arith.addf %28, %30 : vector<1x128xf32>
    %c0_10 = arith.constant 0 : index
    %c0_11 = arith.constant 0 : index
    %32 = vector.load %arg8[%c0_10, %c0_11] : memref<1x128xf32, #tpu.memory_space<vmem>>, vector<1x128xf32>
    tpu.vector_store %arg8[%c0_10, %c0_11], %31 {strides = array<i32>} : memref<1x128xf32, #tpu.memory_space<vmem>>, vector<1x128xf32>,
    %c1_i32 = arith.constant 1 : i32
    %33 = arith.cmpi eq, %arg1, %c1_i32 : i32
    %34 = arith.extui %33 : i1 to i32
    %c0_i32_12 = arith.constant 0 : i32
    %35 = arith.cmpi ne, %34, %c0_i32_12 : i32
    scf.if %35 {
      %c0_13 = arith.constant 0 : index
      %c0_14 = arith.constant 0 : index
      %36 = vector.load %arg8[%c0_13, %c0_14] : memref<1x128xf32, #tpu.memory_space<vmem>>, vector<1x128xf32>
      %cst_15 = arith.constant 9.765625E-4 : f32
      %37 = vector.broadcast %cst_15 : f32 to vector<1x128xf32>
      %38 = arith.mulf %36, %37 : vector<1x128xf32>
      %c0_16 = arith.constant 0 : index
      %c0_17 = arith.constant 0 : index
      %39 = vector.load %arg5[%c0_16, %c0_17] : memref<128x128xf32, #tpu.memory_space<vmem>>, vector<128x128xf32>
      %cst_18 = arith.constant dense<0.000000e+00> : vector<1x128xf32>
      %40 = tpu.matmul %38, %39, %cst_18 {dimension_numbers = #tpu.dot_dimension_numbers<[1], [0], [0], [1], [0, 0, 1, 1], [], []>} : vector<1x128xf32>, vector<128x128xf32>, vector<1x128xf32> -> vector<1x128xf32>
      %c0_19 = arith.constant 0 : index
      %c0_20 = arith.constant 0 : index
      %41 = vector.load %arg6[%c0_19, %c0_20] : memref<1x128xf32, #tpu.memory_space<vmem>>, vector<1x128xf32>
      %42 = arith.addf %40, %41 : vector<1x128xf32>
      %43 = vector.shape_cast %42 : vector<1x128xf32> to vector<1x1x128xf32>
      %c0_21 = arith.constant 0 : index
      %c0_22 = arith.constant 0 : index
      %c0_23 = arith.constant 0 : index
      %44 = vector.load %arg7[%c0_21, %c0_22, %c0_23] : memref<1x1x128xf32, #tpu.memory_space<vmem>>, vector<1x1x128xf32>
      tpu.vector_store %arg7[%c0_21, %c0_22, %c0_23], %43 {strides = array<i32>} : memref<1x1x128xf32, #tpu.memory_space<vmem>>, vector<1x1x128xf32>,
    } else {
    }
    return
  }
  func.func @transform_0(%arg0: i32, %arg1: i32) -> (i32, i32, i32) {
    %c0_i32 = arith.constant 0 : i32
    %c0_i32_0 = arith.constant 0 : i32
    return %arg0, %arg1, %c0_i32 : i32, i32, i32
  }
  func.func @transform_1(%arg0: i32, %arg1: i32) -> (i32, i32) {
    %c0_i32 = arith.constant 0 : i32
    %c0_i32_0 = arith.constant 0 : i32
    %c0_i32_1 = arith.constant 0 : i32
    return %c0_i32, %c0_i32_0 : i32, i32
  }
  func.func @transform_2(%arg0: i32, %arg1: i32) -> (i32, i32) {
    %c0_i32 = arith.constant 0 : i32
    %c0_i32_0 = arith.constant 0 : i32
    %c0_i32_1 = arith.constant 0 : i32
    return %c0_i32, %c0_i32_0 : i32, i32
  }
  func.func @transform_3(%arg0: i32, %arg1: i32) -> (i32, i32) {
    %c0_i32 = arith.constant 0 : i32
    %c0_i32_0 = arith.constant 0 : i32
    %c0_i32_1 = arith.constant 0 : i32
    return %c0_i32, %c0_i32_0 : i32, i32
  }
  func.func @transform_4(%arg0: i32, %arg1: i32) -> (i32, i32) {
    %c0_i32 = arith.constant 0 : i32
    %c0_i32_0 = arith.constant 0 : i32
    %c0_i32_1 = arith.constant 0 : i32
    return %c0_i32, %c0_i32_0 : i32, i32
  }
  func.func @transform_5(%arg0: i32, %arg1: i32) -> (i32, i32, i32) {
    %c0_i32 = arith.constant 0 : i32
    %c0_i32_0 = arith.constant 0 : i32
    %c0_i32_1 = arith.constant 0 : i32
    return %arg0, %c0_i32, %c0_i32_0 : i32, i32, i32
  }
}

</mosaic_0001>

<llo_original>
// kernel: tpu_custom_call.1
$region0: #{tpu_custom_call.1}
  #allocation0 [shape = 'u32[]', space=smem, size = 0x4, offset = 0x4, fixed_abs, tag = 'smem constant byte address 0x4 - core index']
  #allocation1 [shape = 'u32[144,128]{1,0:T(1,128)}', space=vmem, size = 0x12000, scoped, tag = 'internal scratch']
  #allocation2 [shape = 'f32[1,128]{1,0:T(1,128)}', space=vmem, size = 0x200, scoped, tag = 'scratch operand']
  %s0 = inlined_call_operand.vmem [shape: f32[2,1024,3], index: 0, kind: input, shape index: {}]
  %s1 = inlined_call_operand.vmem [shape: f32[3,128], index: 1, kind: input, shape index: {}]
  %s2 = inlined_call_operand.vmem [shape: f32[1,128], index: 2, kind: input, shape index: {}]
  %s3 = inlined_call_operand.vmem [shape: f32[128,128], index: 3, kind: input, shape index: {}]
  %s4 = inlined_call_operand.vmem [shape: f32[1,128], index: 4, kind: input, shape index: {}]
  %s5 = inlined_call_operand.hbm [shape: f32[2,1,128], index: 5, kind: output, shape index: {}]
  %s6 = sld [smem:[#allocation0]]
  $region61: #{tpu_custom_call.1} parent=0
    _
  %s8 = ssub.s32 1, %s6
  %s9 = scalar_select 0, %s8, %s6
  $region1: #{tpu_custom_call.1} parent=0
    #allocation3 [shape = 'u8[1024]{0}', space=vmem, size = 0x400, scoped, tag = 'output window, operand 0']
    #allocation4 [shape = 's32[2]{0}', space=sflag, size = 0x8, scoped, tag = 'scoped memory for tpu_custom_call.1']
    %10 = vsyncpa [#allocation4], 0
    %s11 = scalar_lea.sflag [#allocation4], 1
    %12 = vsyncpa %s11, 0
    loop: start=0, step=1, limit=6
    $region2: #{tpu_custom_call.1} parent=1 // loop_pre_header
      _
    $region3: #{tpu_custom_call.1} parent=1 // loop_header
      %s14 = sphi 0, %s18
      %p15 = scmp.ge.s32.totalorder %s14, 6
      %s21 = sphi 0, %s33
      %s22 = sphi 0, %s29
      %s23 = sphi 0, %s21
      %s24 = sphi 0, %s22
      %s25 = sphi 0, %s23
      %s26 = sphi 0, %s24
      %s38 = sphi 0, %s40
      %s41 = sphi 0, %s38
      %s42 = sphi 0, %s41
      %s58 = sphi 0, %s42
      %s62 = sphi 0, %s62
      %s64 = sphi 0, %s62
      %s65 = sphi 0, %s64
      %s79 = sphi 0, %s65
      %s83 = sphi 0, %s83
      %s85 = sphi 0, %s83
      %s86 = sphi 0, %s85
      %s100 = sphi 0, %s86
      %s104 = sphi 0, %s104
      %s106 = sphi 0, %s104
      %s107 = sphi 0, %s106
      %s121 = sphi 0, %s107
      %s125 = sphi 0, %s125
      %s127 = sphi 0, %s125
      %s128 = sphi 0, %s127
      %s142 = sphi 0, %s128
      %s148 = sphi 0, %s150
      %s151 = sphi 0, %s148
      %s152 = sphi 0, %s151
      %s168 = sphi 0, %s152
    $region4: #{tpu_custom_call.1} parent=1 // loop_header_branch
      %17 = sbr.rel (%p15) target = $region8
    $region5: #{tpu_custom_call.1} parent=1 // loop_body
      %s19 = ssub.s32 %s14, 1
      %s20 = ssub.s32 %s14, 2
      %s27 = sadd.s32 1, %s22
      %p28 = scmp.ge.s32.totalorder %s27, 2
      %s29 = scalar_select %p28, 0, %s27
      %s30 = sadd.s32 1, %s21
      %s31 = scalar_select %p28, %s30, %s21
      %p32 = scmp.ge.s32.totalorder %s31, 2
      %s33 = scalar_select %p32, 0, %s31
      %s34 = ssub.s32 %s21, %s33
      %s35 = ssub.s32 %s22, %s29
      %s36 = sor.u32 %s34, %s35
      %p37 = scmp.eq.s32.totalorder %s36, 0
      %s39 = sadd.s32 %s38, 1
      %s40 = scalar_select %p37, %s38, %s39
      %p43 = pneg %p37
      %p44 = scmp.eq.s32.totalorder %s14, 3
      %p45 = por %p43, %p44
      %p46 = scmp.ne.s32.totalorder %s38, %s41
      %p47 = scmp.eq.s32.totalorder %s14, 0
      %p48 = por %p46, %p47
      %p49 = scmp.ne.s32.totalorder %s38, %s41
      %p50 = scmp.eq.s32.totalorder %s19, 3
      %p51 = por %p49, %p50
      %p52 = scmp.ne.s32.totalorder %s41, %s42
      %p53 = scmp.eq.s32.totalorder %s19, 0
      %p54 = por %p52, %p53
      %p55 = scmp.ne.s32.totalorder %s41, %s42
      %p56 = scmp.eq.s32.totalorder %s20, 3
      %p57 = por %p55, %p56
      %p59 = scmp.ne.s32.totalorder %s42, %s58
      %p60 = scmp.eq.s32.totalorder %s20, 0
      %p61 = por %p59, %p60
      %s63 = sadd.s32 %s62, 1
      %p66 = scmp.eq.s32.totalorder %s14, 3
      %p67 = scmp.ne.s32.totalorder %s62, %s64
      %p68 = scmp.eq.s32.totalorder %s14, 0
      %p69 = por %p67, %p68
      %p70 = scmp.ne.s32.totalorder %s62, %s64
      %p71 = scmp.eq.s32.totalorder %s19, 3
      %p72 = por %p70, %p71
      %p73 = scmp.ne.s32.totalorder %s64, %s65
      %p74 = scmp.eq.s32.totalorder %s19, 0
      %p75 = por %p73, %p74
      %p76 = scmp.ne.s32.totalorder %s64, %s65
      %p77 = scmp.eq.s32.totalorder %s20, 3
      %p78 = por %p76, %p77
      %p80 = scmp.ne.s32.totalorder %s65, %s79
      %p81 = scmp.eq.s32.totalorder %s20, 0
      %p82 = por %p80, %p81
      %s84 = sadd.s32 %s83, 1
      %p87 = scmp.eq.s32.totalorder %s14, 3
      %p88 = scmp.ne.s32.totalorder %s83, %s85
      %p89 = scmp.eq.s32.totalorder %s14, 0
      %p90 = por %p88, %p89
      %p91 = scmp.ne.s32.totalorder %s83, %s85
      %p92 = scmp.eq.s32.totalorder %s19, 3
      %p93 = por %p91, %p92
      %p94 = scmp.ne.s32.totalorder %s85, %s86
      %p95 = scmp.eq.s32.totalorder %s19, 0
      %p96 = por %p94, %p95
      %p97 = scmp.ne.s32.totalorder %s85, %s86
      %p98 = scmp.eq.s32.totalorder %s20, 3
      %p99 = por %p97, %p98
      %p101 = scmp.ne.s32.totalorder %s86, %s100
      %p102 = scmp.eq.s32.totalorder %s20, 0
      %p103 = por %p101, %p102
      %s105 = sadd.s32 %s104, 1
      %p108 = scmp.eq.s32.totalorder %s14, 3
      %p109 = scmp.ne.s32.totalorder %s104, %s106
      %p110 = scmp.eq.s32.totalorder %s14, 0
      %p111 = por %p109, %p110
      %p112 = scmp.ne.s32.totalorder %s104, %s106
      %p113 = scmp.eq.s32.totalorder %s19, 3
      %p114 = por %p112, %p113
      %p115 = scmp.ne.s32.totalorder %s106, %s107
      %p116 = scmp.eq.s32.totalorder %s19, 0
      %p117 = por %p115, %p116
      %p118 = scmp.ne.s32.totalorder %s106, %s107
      %p119 = scmp.eq.s32.totalorder %s20, 3
      %p120 = por %p118, %p119
      %p122 = scmp.ne.s32.totalorder %s107, %s121
      %p123 = scmp.eq.s32.totalorder %s20, 0
      %p124 = por %p122, %p123
      %s126 = sadd.s32 %s125, 1
      %p129 = scmp.eq.s32.totalorder %s14, 3
      %p130 = scmp.ne.s32.totalorder %s125, %s127
      %p131 = scmp.eq.s32.totalorder %s14, 0
      %p132 = por %p130, %p131
      %p133 = scmp.ne.s32.totalorder %s125, %s127
      %p134 = scmp.eq.s32.totalorder %s19, 3
      %p135 = por %p133, %p134
      %p136 = scmp.ne.s32.totalorder %s127, %s128
      %p137 = scmp.eq.s32.totalorder %s19, 0
      %p138 = por %p136, %p137
      %p139 = scmp.ne.s32.totalorder %s127, %s128
      %p140 = scmp.eq.s32.totalorder %s20, 3
      %p141 = por %p139, %p140
      %p143 = scmp.ne.s32.totalorder %s128, %s142
      %p144 = scmp.eq.s32.totalorder %s20, 0
      %p145 = por %p143, %p144
      %s146 = ssub.s32 %s21, %s33
      %p147 = scmp.eq.s32.totalorder %s146, 0
      %s149 = sadd.s32 %s148, 1
      %s150 = scalar_select %p147, %s148, %s149
      %p153 = pneg %p147
      %p154 = scmp.eq.s32.totalorder %s14, 3
      %p155 = por %p153, %p154
      %p156 = scmp.ne.s32.totalorder %s148, %s151
      %p157 = scmp.eq.s32.totalorder %s14, 0
      %p158 = por %p156, %p157
      %p159 = scmp.ne.s32.totalorder %s148, %s151
      %p160 = scmp.eq.s32.totalorder %s19, 3
      %p161 = por %p159, %p160
      %p162 = scmp.ne.s32.totalorder %s151, %s152
      %p163 = scmp.eq.s32.totalorder %s19, 0
      %p164 = por %p162, %p163
      %p165 = scmp.ne.s32.totalorder %s151, %s152
      %p166 = scmp.eq.s32.totalorder %s20, 3
      %p167 = por %p165, %p166
      %p169 = scmp.ne.s32.totalorder %s152, %s168
      %p170 = scmp.eq.s32.totalorder %s20, 0
      %p171 = por %p169, %p170
      %p172 = scmp.le.s32.totalorder 1, %s14
      %p173 = scmp.lt.s32.totalorder %s14, 5
      %p174 = pnand %p172, %p173
      %p175 = pneg %p174
      // Predicated region
      $region9: #{tpu_custom_call.1} parent=5 // pred_check
        _
      $region10: #{tpu_custom_call.1} parent=5 // pred_check_branch
        %177 = sbr.rel (%p174) target = $region12
      $region11: #{tpu_custom_call.1} parent=5 // pred_region
        %s178 = ssub.s32 %s14, 1
        // Predicated region
        $region13: #{tpu_custom_call.1} parent=11 // pred_check
          %p179 = pneg %p75
        $region14: #{tpu_custom_call.1} parent=11 // pred_check_branch
          %181 = sbr.rel (%p179) target = $region16
        $region15: #{tpu_custom_call.1} parent=11 // pred_region
          _
        $region16: #{tpu_custom_call.1} parent=11 // pred_fallthru
          _
        // Predicated region
        $region17: #{tpu_custom_call.1} parent=11 // pred_check
          %p182 = pneg %p96
        $region18: #{tpu_custom_call.1} parent=11 // pred_check_branch
          %184 = sbr.rel (%p182) target = $region20
        $region19: #{tpu_custom_call.1} parent=11 // pred_region
          _
        $region20: #{tpu_custom_call.1} parent=11 // pred_fallthru
          _
        // Predicated region
        $region21: #{tpu_custom_call.1} parent=11 // pred_check
          %p185 = pneg %p117
        $region22: #{tpu_custom_call.1} parent=11 // pred_check_branch
          %187 = sbr.rel (%p185) target = $region24
        $region23: #{tpu_custom_call.1} parent=11 // pred_region
          _
        $region24: #{tpu_custom_call.1} parent=11 // pred_fallthru
          _
        // Predicated region
        $region25: #{tpu_custom_call.1} parent=11 // pred_check
          %p188 = pneg %p138
        $region26: #{tpu_custom_call.1} parent=11 // pred_check_branch
          %190 = sbr.rel (%p188) target = $region28
        $region27: #{tpu_custom_call.1} parent=11 // pred_region
          _
        $region28: #{tpu_custom_call.1} parent=11 // pred_fallthru
          _
      $region12: #{tpu_custom_call.1} parent=5 // pred_fallthru
        _
      %p191 = scmp.lt.s32.totalorder %s14, 4
      // Predicated region
      $region29: #{tpu_custom_call.1} parent=5 // pred_check
        %p192 = pneg %p191
      $region30: #{tpu_custom_call.1} parent=5 // pred_check_branch
        %194 = sbr.rel (%p192) target = $region32
      $region31: #{tpu_custom_call.1} parent=5 // pred_region
        // Predicated region
        $region33: #{tpu_custom_call.1} parent=31 // pred_check
          %p195 = pneg %p48
        $region34: #{tpu_custom_call.1} parent=31 // pred_check_branch
          %197 = sbr.rel (%p195) target = $region36
        $region35: #{tpu_custom_call.1} parent=31 // pred_region
          %s198 = smul.u32 64, %s22
          %p199 = scmp.lt.s32.totalorder %s21, 1
          %s200 = scalar_select %p199, %s21, 1
          %p201 = scmp.lt.s32.totalorder %s198, 127
          %s202 = scalar_select %p201, %s198, 127
          %s203 = smul.addr %s200, 128
          %s204 = sadd.s32 %s202, %s203
          %s205 = smul.addr %s204, 8
          %s206 = scalar_lea.vmem %s0, %s205
          %s207 = smul.u32 64, %s22
        $region36: #{tpu_custom_call.1} parent=31 // pred_fallthru
          _
      $region32: #{tpu_custom_call.1} parent=5 // pred_fallthru
        _
      %p208 = scmp.le.s32.totalorder 1, %s14
      %p209 = scmp.lt.s32.totalorder %s14, 5
      %p210 = pnand %p208, %p209
      %p211 = pneg %p210
      // Predicated region
      $region37: #{tpu_custom_call.1} parent=5 // pred_check
        _
      $region38: #{tpu_custom_call.1} parent=5 // pred_check_branch
        %213 = sbr.rel (%p210) target = $region40
      $region39: #{tpu_custom_call.1} parent=5 // pred_region
        %s214 = ssub.s32 %s14, 1
        %s215 = smul.u32 64, %s24
        %p216 = scmp.lt.s32.totalorder %s23, 1
        %s217 = scalar_select %p216, %s23, 1
        %p218 = scmp.lt.s32.totalorder %s215, 127
        %s219 = scalar_select %p218, %s215, 127
        %s220 = smul.addr %s217, 128
        %s221 = sadd.s32 %s219, %s220
        %s222 = smul.addr %s221, 8
        %s223 = scalar_lea.vmem %s0, %s222
        %p224 = pneg %p54
        %p225 = pneg %p51
        %p226 = pneg %p75
        %p227 = pneg %p72
        %p228 = pneg %p96
        %p229 = pneg %p93
        %p230 = pneg %p117
        %p231 = pneg %p114
        %p232 = pneg %p138
        %p233 = pneg %p135
        %p234 = pneg %p164
        %p235 = pneg %p161
        %s236 = sand.u32 %s151, 1
        %s237 = scalar_lea.sflag [#allocation4], %s236
        %s238 = sand.u32 %s151, 1
        %s239 = scalar_lea.vmem [#allocation3], %s238
        %s240 = smul.u32 64, %s24
        %p241 = scmp.lt.s32.totalorder %s23, 1
        %s242 = scalar_select %p241, %s23, 1
        %p243 = scmp.lt.s32.totalorder %s240, 127
        %s244 = scalar_select %p243, %s240, 127
        %s245 = smul.addr %s242, 128
        %s246 = sadd.s32 %s244, %s245
        %s247 = smul.addr %s246, 8
        %s248 = scalar_lea.vmem %s0, %s247
        %s249 = smul.u32 64, %s24
        %p250 = scmp.eq.s32.totalorder %s24, 0
        // Predicated region
        $region41: #{tpu_custom_call.1} parent=39 // pred_check
          %p251 = pneg %p250
        $region42: #{tpu_custom_call.1} parent=39 // pred_check_branch
          %253 = sbr.rel (%p251) target = $region44
        $region43: #{tpu_custom_call.1} parent=39 // pred_region
          %254 = vst [vmem:[#allocation2] sm:$0x1] 0.0
        $region44: #{tpu_custom_call.1} parent=39 // pred_fallthru
          _
        %v255 = vld [vmem:[%s248] sm:$0xff]
        %v256 = vld [vmem:[%s248 + $0x8] sm:$0xff]
        %v257 = vld [vmem:[%s248 + $0x10] sm:$0xff]
        %v258 = vld [vmem:[%s248 + $0x18] sm:$0xff]
        %v259 = vld [vmem:[%s248 + $0x20] sm:$0xff]
        %v260 = vld [vmem:[%s248 + $0x28] sm:$0xff]
        %v261 = vld [vmem:[%s248 + $0x30] sm:$0xff]
        %v262 = vld [vmem:[%s248 + $0x38] sm:$0xff]
        %v263 = vld [vmem:[%s248 + $0x40] sm:$0xff]
        %v264 = vld [vmem:[%s248 + $0x48] sm:$0xff]
        %v265 = vld [vmem:[%s248 + $0x50] sm:$0xff]
        %v266 = vld [vmem:[%s248 + $0x58] sm:$0xff]
        %v267 = vld [vmem:[%s248 + $0x60] sm:$0xff]
        %v268 = vld [vmem:[%s248 + $0x68] sm:$0xff]
        %v269 = vld [vmem:[%s248 + $0x70] sm:$0xff]
        %v270 = vld [vmem:[%s248 + $0x78] sm:$0xff]
        %v271 = vld [vmem:[%s248 + $0x80] sm:$0xff]
        %v272 = vld [vmem:[%s248 + $0x88] sm:$0xff]
        %v273 = vld [vmem:[%s248 + $0x90] sm:$0xff]
        %v274 = vld [vmem:[%s248 + $0x98] sm:$0xff]
        %v275 = vld [vmem:[%s248 + $0xa0] sm:$0xff]
        %v276 = vld [vmem:[%s248 + $0xa8] sm:$0xff]
        %v277 = vld [vmem:[%s248 + $0xb0] sm:$0xff]
        %v278 = vld [vmem:[%s248 + $0xb8] sm:$0xff]
        %v279 = vld [vmem:[%s248 + $0xc0] sm:$0xff]
        %v280 = vld [vmem:[%s248 + $0xc8] sm:$0xff]
        %v281 = vld [vmem:[%s248 + $0xd0] sm:$0xff]
        %v282 = vld [vmem:[%s248 + $0xd8] sm:$0xff]
        %v283 = vld [vmem:[%s248 + $0xe0] sm:$0xff]
        %v284 = vld [vmem:[%s248 + $0xe8] sm:$0xff]
        %v285 = vld [vmem:[%s248 + $0xf0] sm:$0xff]
        %v286 = vld [vmem:[%s248 + $0xf8] sm:$0xff]
        %v287 = vld [vmem:[%s248 + $0x100] sm:$0xff]
        %v288 = vld [vmem:[%s248 + $0x108] sm:$0xff]
        %v289 = vld [vmem:[%s248 + $0x110] sm:$0xff]
        %v290 = vld [vmem:[%s248 + $0x118] sm:$0xff]
        %v291 = vld [vmem:[%s248 + $0x120] sm:$0xff]
        %v292 = vld [vmem:[%s248 + $0x128] sm:$0xff]
        %v293 = vld [vmem:[%s248 + $0x130] sm:$0xff]
        %v294 = vld [vmem:[%s248 + $0x138] sm:$0xff]
        %v295 = vld [vmem:[%s248 + $0x140] sm:$0xff]
        %v296 = vld [vmem:[%s248 + $0x148] sm:$0xff]
        %v297 = vld [vmem:[%s248 + $0x150] sm:$0xff]
        %v298 = vld [vmem:[%s248 + $0x158] sm:$0xff]
        %v299 = vld [vmem:[%s248 + $0x160] sm:$0xff]
        %v300 = vld [vmem:[%s248 + $0x168] sm:$0xff]
        %v301 = vld [vmem:[%s248 + $0x170] sm:$0xff]
        %v302 = vld [vmem:[%s248 + $0x178] sm:$0xff]
        %v303 = vld [vmem:[%s248 + $0x180] sm:$0xff]
        %v304 = vld [vmem:[%s248 + $0x188] sm:$0xff]
        %v305 = vld [vmem:[%s248 + $0x190] sm:$0xff]
        %v306 = vld [vmem:[%s248 + $0x198] sm:$0xff]
        %v307 = vld [vmem:[%s248 + $0x1a0] sm:$0xff]
        %v308 = vld [vmem:[%s248 + $0x1a8] sm:$0xff]
        %v309 = vld [vmem:[%s248 + $0x1b0] sm:$0xff]
        %v310 = vld [vmem:[%s248 + $0x1b8] sm:$0xff]
        %v311 = vld [vmem:[%s248 + $0x1c0] sm:$0xff]
        %v312 = vld [vmem:[%s248 + $0x1c8] sm:$0xff]
        %v313 = vld [vmem:[%s248 + $0x1d0] sm:$0xff]
        %v314 = vld [vmem:[%s248 + $0x1d8] sm:$0xff]
        %v315 = vld [vmem:[%s248 + $0x1e0] sm:$0xff]
        %v316 = vld [vmem:[%s248 + $0x1e8] sm:$0xff]
        %v317 = vld [vmem:[%s248 + $0x1f0] sm:$0xff]
        %v318 = vld [vmem:[%s248 + $0x1f8] sm:$0xff]
        %v319 = vld [vmem:[%s1] sm:$0x7]
        %321 = vset.pattern.permute.xlu0 0
        %322 = vperm.xlu0 %321, %v255
        %v323 = vpop.permute.xlu0 %322
        %326 = vset.pattern.permute.xlu0 0
        %327 = vperm.xlu0 %326, %v256
        %v328 = vpop.permute.xlu0 %327
        %331 = vset.pattern.permute.xlu0 0
        %332 = vperm.xlu0 %331, %v257
        %v333 = vpop.permute.xlu0 %332
        %336 = vset.pattern.permute.xlu0 0
        %337 = vperm.xlu0 %336, %v258
        %v338 = vpop.permute.xlu0 %337
        %341 = vset.pattern.permute.xlu0 0
        %342 = vperm.xlu0 %341, %v259
        %v343 = vpop.permute.xlu0 %342
        %346 = vset.pattern.permute.xlu0 0
        %347 = vperm.xlu0 %346, %v260
        %v348 = vpop.permute.xlu0 %347
        %351 = vset.pattern.permute.xlu0 0
        %352 = vperm.xlu0 %351, %v261
        %v353 = vpop.permute.xlu0 %352
        %356 = vset.pattern.permute.xlu0 0
        %357 = vperm.xlu0 %356, %v262
        %v358 = vpop.permute.xlu0 %357
        %361 = vset.pattern.permute.xlu0 0
        %362 = vperm.xlu0 %361, %v263
        %v363 = vpop.permute.xlu0 %362
        %366 = vset.pattern.permute.xlu0 0
        %367 = vperm.xlu0 %366, %v264
        %v368 = vpop.permute.xlu0 %367
        %371 = vset.pattern.permute.xlu0 0
        %372 = vperm.xlu0 %371, %v265
        %v373 = vpop.permute.xlu0 %372
        %376 = vset.pattern.permute.xlu0 0
        %377 = vperm.xlu0 %376, %v266
        %v378 = vpop.permute.xlu0 %377
        %381 = vset.pattern.permute.xlu0 0
        %382 = vperm.xlu0 %381, %v267
        %v383 = vpop.permute.xlu0 %382
        %386 = vset.pattern.permute.xlu0 0
        %387 = vperm.xlu0 %386, %v268
        %v388 = vpop.permute.xlu0 %387
        %391 = vset.pattern.permute.xlu0 0
        %392 = vperm.xlu0 %391, %v269
        %v393 = vpop.permute.xlu0 %392
        %396 = vset.pattern.permute.xlu0 0
        %397 = vperm.xlu0 %396, %v270
        %v398 = vpop.permute.xlu0 %397
        %401 = vset.pattern.permute.xlu0 0
        %402 = vperm.xlu0 %401, %v271
        %v403 = vpop.permute.xlu0 %402
        %406 = vset.pattern.permute.xlu0 0
        %407 = vperm.xlu0 %406, %v272
        %v408 = vpop.permute.xlu0 %407
        %411 = vset.pattern.permute.xlu0 0
        %412 = vperm.xlu0 %411, %v273
        %v413 = vpop.permute.xlu0 %412
        %416 = vset.pattern.permute.xlu0 0
        %417 = vperm.xlu0 %416, %v274
        %v418 = vpop.permute.xlu0 %417
        %421 = vset.pattern.permute.xlu0 0
        %422 = vperm.xlu0 %421, %v275
        %v423 = vpop.permute.xlu0 %422
        %426 = vset.pattern.permute.xlu0 0
        %427 = vperm.xlu0 %426, %v276
        %v428 = vpop.permute.xlu0 %427
        %431 = vset.pattern.permute.xlu0 0
        %432 = vperm.xlu0 %431, %v277
        %v433 = vpop.permute.xlu0 %432
        %436 = vset.pattern.permute.xlu0 0
        %437 = vperm.xlu0 %436, %v278
        %v438 = vpop.permute.xlu0 %437
        %441 = vset.pattern.permute.xlu0 0
        %442 = vperm.xlu0 %441, %v279
        %v443 = vpop.permute.xlu0 %442
        %446 = vset.pattern.permute.xlu0 0
        %447 = vperm.xlu0 %446, %v280
        %v448 = vpop.permute.xlu0 %447
        %451 = vset.pattern.permute.xlu0 0
        %452 = vperm.xlu0 %451, %v281
        %v453 = vpop.permute.xlu0 %452
        %456 = vset.pattern.permute.xlu0 0
        %457 = vperm.xlu0 %456, %v282
        %v458 = vpop.permute.xlu0 %457
        %461 = vset.pattern.permute.xlu0 0
        %462 = vperm.xlu0 %461, %v283
        %v463 = vpop.permute.xlu0 %462
        %466 = vset.pattern.permute.xlu0 0
        %467 = vperm.xlu0 %466, %v284
        %v468 = vpop.permute.xlu0 %467
        %471 = vset.pattern.permute.xlu0 0
        %472 = vperm.xlu0 %471, %v285
        %v473 = vpop.permute.xlu0 %472
        %476 = vset.pattern.permute.xlu0 0
        %477 = vperm.xlu0 %476, %v286
        %v478 = vpop.permute.xlu0 %477
        %481 = vset.pattern.permute.xlu0 0
        %482 = vperm.xlu0 %481, %v287
        %v483 = vpop.permute.xlu0 %482
        %486 = vset.pattern.permute.xlu0 0
        %487 = vperm.xlu0 %486, %v288
        %v488 = vpop.permute.xlu0 %487
        %491 = vset.pattern.permute.xlu0 0
        %492 = vperm.xlu0 %491, %v289
        %v493 = vpop.permute.xlu0 %492
        %496 = vset.pattern.permute.xlu0 0
        %497 = vperm.xlu0 %496, %v290
        %v498 = vpop.permute.xlu0 %497
        %501 = vset.pattern.permute.xlu0 0
        %502 = vperm.xlu0 %501, %v291
        %v503 = vpop.permute.xlu0 %502
        %506 = vset.pattern.permute.xlu0 0
        %507 = vperm.xlu0 %506, %v292
        %v508 = vpop.permute.xlu0 %507
        %511 = vset.pattern.permute.xlu0 0
        %512 = vperm.xlu0 %511, %v293
        %v513 = vpop.permute.xlu0 %512
        %516 = vset.pattern.permute.xlu0 0
        %517 = vperm.xlu0 %516, %v294
        %v518 = vpop.permute.xlu0 %517
        %521 = vset.pattern.permute.xlu0 0
        %522 = vperm.xlu0 %521, %v295
        %v523 = vpop.permute.xlu0 %522
        %526 = vset.pattern.permute.xlu0 0
        %527 = vperm.xlu0 %526, %v296
        %v528 = vpop.permute.xlu0 %527
        %531 = vset.pattern.permute.xlu0 0
        %532 = vperm.xlu0 %531, %v297
        %v533 = vpop.permute.xlu0 %532
        %536 = vset.pattern.permute.xlu0 0
        %537 = vperm.xlu0 %536, %v298
        %v538 = vpop.permute.xlu0 %537
        %541 = vset.pattern.permute.xlu0 0
        %542 = vperm.xlu0 %541, %v299
        %v543 = vpop.permute.xlu0 %542
        %546 = vset.pattern.permute.xlu0 0
        %547 = vperm.xlu0 %546, %v300
        %v548 = vpop.permute.xlu0 %547
        %551 = vset.pattern.permute.xlu0 0
        %552 = vperm.xlu0 %551, %v301
        %v553 = vpop.permute.xlu0 %552
        %556 = vset.pattern.permute.xlu0 0
        %557 = vperm.xlu0 %556, %v302
        %v558 = vpop.permute.xlu0 %557
        %561 = vset.pattern.permute.xlu0 0
        %562 = vperm.xlu0 %561, %v303
        %v563 = vpop.permute.xlu0 %562
        %566 = vset.pattern.permute.xlu0 0
        %567 = vperm.xlu0 %566, %v304
        %v568 = vpop.permute.xlu0 %567
        %571 = vset.pattern.permute.xlu0 0
        %572 = vperm.xlu0 %571, %v305
        %v573 = vpop.permute.xlu0 %572
        %576 = vset.pattern.permute.xlu0 0
        %577 = vperm.xlu0 %576, %v306
        %v578 = vpop.permute.xlu0 %577
        %581 = vset.pattern.permute.xlu0 0
        %582 = vperm.xlu0 %581, %v307
        %v583 = vpop.permute.xlu0 %582
        %586 = vset.pattern.permute.xlu0 0
        %587 = vperm.xlu0 %586, %v308
        %v588 = vpop.permute.xlu0 %587
        %591 = vset.pattern.permute.xlu0 0
        %592 = vperm.xlu0 %591, %v309
        %v593 = vpop.permute.xlu0 %592
        %596 = vset.pattern.permute.xlu0 0
        %597 = vperm.xlu0 %596, %v310
        %v598 = vpop.permute.xlu0 %597
        %601 = vset.pattern.permute.xlu0 0
        %602 = vperm.xlu0 %601, %v311
        %v603 = vpop.permute.xlu0 %602
        %606 = vset.pattern.permute.xlu0 0
        %607 = vperm.xlu0 %606, %v312
        %v608 = vpop.permute.xlu0 %607
        %611 = vset.pattern.permute.xlu0 0
        %612 = vperm.xlu0 %611, %v313
        %v613 = vpop.permute.xlu0 %612
        %616 = vset.pattern.permute.xlu0 0
        %617 = vperm.xlu0 %616, %v314
        %v618 = vpop.permute.xlu0 %617
        %621 = vset.pattern.permute.xlu0 0
        %622 = vperm.xlu0 %621, %v315
        %v623 = vpop.permute.xlu0 %622
        %626 = vset.pattern.permute.xlu0 0
        %627 = vperm.xlu0 %626, %v316
        %v628 = vpop.permute.xlu0 %627
        %631 = vset.pattern.permute.xlu0 0
        %632 = vperm.xlu0 %631, %v317
        %v633 = vpop.permute.xlu0 %632
        %636 = vset.pattern.permute.xlu0 0
        %637 = vperm.xlu0 %636, %v318
        %v638 = vpop.permute.xlu0 %637
        %v640 = vlaneseq
        %v641 = vshrl.u32 %v640, 7
        %v642 = vsub.s32 0, %v641
        %v643 = vrot.slane %v319, %v642
        %v644 = vmul.f32 %v323, %v643
        %v645 = vmul.f32 %v328, %v643
        %v646 = vmul.f32 %v333, %v643
        %v647 = vmul.f32 %v338, %v643
        %v648 = vmul.f32 %v343, %v643
        %v649 = vmul.f32 %v348, %v643
        %v650 = vmul.f32 %v353, %v643
        %v651 = vmul.f32 %v358, %v643
        %v652 = vmul.f32 %v363, %v643
        %v653 = vmul.f32 %v368, %v643
        %v654 = vmul.f32 %v373, %v643
        %v655 = vmul.f32 %v378, %v643
        %v656 = vmul.f32 %v383, %v643
        %v657 = vmul.f32 %v388, %v643
        %v658 = vmul.f32 %v393, %v643
        %v659 = vmul.f32 %v398, %v643
        %v660 = vmul.f32 %v403, %v643
        %v661 = vmul.f32 %v408, %v643
        %v662 = vmul.f32 %v413, %v643
        %v663 = vmul.f32 %v418, %v643
        %v664 = vmul.f32 %v423, %v643
        %v665 = vmul.f32 %v428, %v643
        %v666 = vmul.f32 %v433, %v643
        %v667 = vmul.f32 %v438, %v643
        %v668 = vmul.f32 %v443, %v643
        %v669 = vmul.f32 %v448, %v643
        %v670 = vmul.f32 %v453, %v643
        %v671 = vmul.f32 %v458, %v643
        %v672 = vmul.f32 %v463, %v643
        %v673 = vmul.f32 %v468, %v643
        %v674 = vmul.f32 %v473, %v643
        %v675 = vmul.f32 %v478, %v643
        %v676 = vmul.f32 %v483, %v643
        %v677 = vmul.f32 %v488, %v643
        %v678 = vmul.f32 %v493, %v643
        %v679 = vmul.f32 %v498, %v643
        %v680 = vmul.f32 %v503, %v643
        %v681 = vmul.f32 %v508, %v643
        %v682 = vmul.f32 %v513, %v643
        %v683 = vmul.f32 %v518, %v643
        %v684 = vmul.f32 %v523, %v643
        %v685 = vmul.f32 %v528, %v643
        %v686 = vmul.f32 %v533, %v643
        %v687 = vmul.f32 %v538, %v643
        %v688 = vmul.f32 %v543, %v643
        %v689 = vmul.f32 %v548, %v643
        %v690 = vmul.f32 %v553, %v643
        %v691 = vmul.f32 %v558, %v643
        %v692 = vmul.f32 %v563, %v643
        %v693 = vmul.f32 %v568, %v643
        %v694 = vmul.f32 %v573, %v643
        %v695 = vmul.f32 %v578, %v643
        %v696 = vmul.f32 %v583, %v643
        %v697 = vmul.f32 %v588, %v643
        %v698 = vmul.f32 %v593, %v643
        %v699 = vmul.f32 %v598, %v643
        %v700 = vmul.f32 %v603, %v643
        %v701 = vmul.f32 %v608, %v643
        %v702 = vmul.f32 %v613, %v643
        %v703 = vmul.f32 %v618, %v643
        %v704 = vmul.f32 %v623, %v643
        %v705 = vmul.f32 %v628, %v643
        %v706 = vmul.f32 %v633, %v643
        %v707 = vmul.f32 %v638, %v643
        %708 = vset.pattern.permute.xlu0 1
        %709 = vperm.xlu0 %708, %v255
        %v710 = vpop.permute.xlu0 %709
        %712 = vset.pattern.permute.xlu0 1
        %713 = vperm.xlu0 %712, %v256
        %v714 = vpop.permute.xlu0 %713
        %716 = vset.pattern.permute.xlu0 1
        %717 = vperm.xlu0 %716, %v257
        %v718 = vpop.permute.xlu0 %717
        %720 = vset.pattern.permute.xlu0 1
        %721 = vperm.xlu0 %720, %v258
        %v722 = vpop.permute.xlu0 %721
        %724 = vset.pattern.permute.xlu0 1
        %725 = vperm.xlu0 %724, %v259
        %v726 = vpop.permute.xlu0 %725
        %728 = vset.pattern.permute.xlu0 1
        %729 = vperm.xlu0 %728, %v260
        %v730 = vpop.permute.xlu0 %729
        %732 = vset.pattern.permute.xlu0 1
        %733 = vperm.xlu0 %732, %v261
        %v734 = vpop.permute.xlu0 %733
        %736 = vset.pattern.permute.xlu0 1
        %737 = vperm.xlu0 %736, %v262
        %v738 = vpop.permute.xlu0 %737
        %740 = vset.pattern.permute.xlu0 1
        %741 = vperm.xlu0 %740, %v263
        %v742 = vpop.permute.xlu0 %741
        %744 = vset.pattern.permute.xlu0 1
        %745 = vperm.xlu0 %744, %v264
        %v746 = vpop.permute.xlu0 %745
        %748 = vset.pattern.permute.xlu0 1
        %749 = vperm.xlu0 %748, %v265
        %v750 = vpop.permute.xlu0 %749
        %752 = vset.pattern.permute.xlu0 1
        %753 = vperm.xlu0 %752, %v266
        %v754 = vpop.permute.xlu0 %753
        %756 = vset.pattern.permute.xlu0 1
        %757 = vperm.xlu0 %756, %v267
        %v758 = vpop.permute.xlu0 %757
        %760 = vset.pattern.permute.xlu0 1
        %761 = vperm.xlu0 %760, %v268
        %v762 = vpop.permute.xlu0 %761
        %764 = vset.pattern.permute.xlu0 1
        %765 = vperm.xlu0 %764, %v269
        %v766 = vpop.permute.xlu0 %765
        %768 = vset.pattern.permute.xlu0 1
        %769 = vperm.xlu0 %768, %v270
        %v770 = vpop.permute.xlu0 %769
        %772 = vset.pattern.permute.xlu0 1
        %773 = vperm.xlu0 %772, %v271
        %v774 = vpop.permute.xlu0 %773
        %776 = vset.pattern.permute.xlu0 1
        %777 = vperm.xlu0 %776, %v272
        %v778 = vpop.permute.xlu0 %777
        %780 = vset.pattern.permute.xlu0 1
        %781 = vperm.xlu0 %780, %v273
        %v782 = vpop.permute.xlu0 %781
        %784 = vset.pattern.permute.xlu0 1
        %785 = vperm.xlu0 %784, %v274
        %v786 = vpop.permute.xlu0 %785
        %788 = vset.pattern.permute.xlu0 1
        %789 = vperm.xlu0 %788, %v275
        %v790 = vpop.permute.xlu0 %789
        %792 = vset.pattern.permute.xlu0 1
        %793 = vperm.xlu0 %792, %v276
        %v794 = vpop.permute.xlu0 %793
        %796 = vset.pattern.permute.xlu0 1
        %797 = vperm.xlu0 %796, %v277
        %v798 = vpop.permute.xlu0 %797
        %800 = vset.pattern.permute.xlu0 1
        %801 = vperm.xlu0 %800, %v278
        %v802 = vpop.permute.xlu0 %801
        %804 = vset.pattern.permute.xlu0 1
        %805 = vperm.xlu0 %804, %v279
        %v806 = vpop.permute.xlu0 %805
        %808 = vset.pattern.permute.xlu0 1
        %809 = vperm.xlu0 %808, %v280
        %v810 = vpop.permute.xlu0 %809
        %812 = vset.pattern.permute.xlu0 1
        %813 = vperm.xlu0 %812, %v281
        %v814 = vpop.permute.xlu0 %813
        %816 = vset.pattern.permute.xlu0 1
        %817 = vperm.xlu0 %816, %v282
        %v818 = vpop.permute.xlu0 %817
        %820 = vset.pattern.permute.xlu0 1
        %821 = vperm.xlu0 %820, %v283
        %v822 = vpop.permute.xlu0 %821
        %824 = vset.pattern.permute.xlu0 1
        %825 = vperm.xlu0 %824, %v284
        %v826 = vpop.permute.xlu0 %825
        %828 = vset.pattern.permute.xlu0 1
        %829 = vperm.xlu0 %828, %v285
        %v830 = vpop.permute.xlu0 %829
        %832 = vset.pattern.permute.xlu0 1
        %833 = vperm.xlu0 %832, %v286
        %v834 = vpop.permute.xlu0 %833
        %836 = vset.pattern.permute.xlu0 1
        %837 = vperm.xlu0 %836, %v287
        %v838 = vpop.permute.xlu0 %837
        %840 = vset.pattern.permute.xlu0 1
        %841 = vperm.xlu0 %840, %v288
        %v842 = vpop.permute.xlu0 %841
        %844 = vset.pattern.permute.xlu0 1
        %845 = vperm.xlu0 %844, %v289
        %v846 = vpop.permute.xlu0 %845
        %848 = vset.pattern.permute.xlu0 1
        %849 = vperm.xlu0 %848, %v290
        %v850 = vpop.permute.xlu0 %849
        %852 = vset.pattern.permute.xlu0 1
        %853 = vperm.xlu0 %852, %v291
        %v854 = vpop.permute.xlu0 %853
        %856 = vset.pattern.permute.xlu0 1
        %857 = vperm.xlu0 %856, %v292
        %v858 = vpop.permute.xlu0 %857
        %860 = vset.pattern.permute.xlu0 1
        %861 = vperm.xlu0 %860, %v293
        %v862 = vpop.permute.xlu0 %861
        %864 = vset.pattern.permute.xlu0 1
        %865 = vperm.xlu0 %864, %v294
        %v866 = vpop.permute.xlu0 %865
        %868 = vset.pattern.permute.xlu0 1
        %869 = vperm.xlu0 %868, %v295
        %v870 = vpop.permute.xlu0 %869
        %872 = vset.pattern.permute.xlu0 1
        %873 = vperm.xlu0 %872, %v296
        %v874 = vpop.permute.xlu0 %873
        %876 = vset.pattern.permute.xlu0 1
        %877 = vperm.xlu0 %876, %v297
        %v878 = vpop.permute.xlu0 %877
        %880 = vset.pattern.permute.xlu0 1
        %881 = vperm.xlu0 %880, %v298
        %v882 = vpop.permute.xlu0 %881
        %884 = vset.pattern.permute.xlu0 1
        %885 = vperm.xlu0 %884, %v299
        %v886 = vpop.permute.xlu0 %885
        %888 = vset.pattern.permute.xlu0 1
        %889 = vperm.xlu0 %888, %v300
        %v890 = vpop.permute.xlu0 %889
        %892 = vset.pattern.permute.xlu0 1
        %893 = vperm.xlu0 %892, %v301
        %v894 = vpop.permute.xlu0 %893
        %896 = vset.pattern.permute.xlu0 1
        %897 = vperm.xlu0 %896, %v302
        %v898 = vpop.permute.xlu0 %897
        %900 = vset.pattern.permute.xlu0 1
        %901 = vperm.xlu0 %900, %v303
        %v902 = vpop.permute.xlu0 %901
        %904 = vset.pattern.permute.xlu0 1
        %905 = vperm.xlu0 %904, %v304
        %v906 = vpop.permute.xlu0 %905
        %908 = vset.pattern.permute.xlu0 1
        %909 = vperm.xlu0 %908, %v305
        %v910 = vpop.permute.xlu0 %909
        %912 = vset.pattern.permute.xlu0 1
        %913 = vperm.xlu0 %912, %v306
        %v914 = vpop.permute.xlu0 %913
        %916 = vset.pattern.permute.xlu0 1
        %917 = vperm.xlu0 %916, %v307
        %v918 = vpop.permute.xlu0 %917
        %920 = vset.pattern.permute.xlu0 1
        %921 = vperm.xlu0 %920, %v308
        %v922 = vpop.permute.xlu0 %921
        %924 = vset.pattern.permute.xlu0 1
        %925 = vperm.xlu0 %924, %v309
        %v926 = vpop.permute.xlu0 %925
        %928 = vset.pattern.permute.xlu0 1
        %929 = vperm.xlu0 %928, %v310
        %v930 = vpop.permute.xlu0 %929
        %932 = vset.pattern.permute.xlu0 1
        %933 = vperm.xlu0 %932, %v311
        %v934 = vpop.permute.xlu0 %933
        %936 = vset.pattern.permute.xlu0 1
        %937 = vperm.xlu0 %936, %v312
        %v938 = vpop.permute.xlu0 %937
        %940 = vset.pattern.permute.xlu0 1
        %941 = vperm.xlu0 %940, %v313
        %v942 = vpop.permute.xlu0 %941
        %944 = vset.pattern.permute.xlu0 1
        %945 = vperm.xlu0 %944, %v314
        %v946 = vpop.permute.xlu0 %945
        %948 = vset.pattern.permute.xlu0 1
        %949 = vperm.xlu0 %948, %v315
        %v950 = vpop.permute.xlu0 %949
        %952 = vset.pattern.permute.xlu0 1
        %953 = vperm.xlu0 %952, %v316
        %v954 = vpop.permute.xlu0 %953
        %956 = vset.pattern.permute.xlu0 1
        %957 = vperm.xlu0 %956, %v317
        %v958 = vpop.permute.xlu0 %957
        %960 = vset.pattern.permute.xlu0 1
        %961 = vperm.xlu0 %960, %v318
        %v962 = vpop.permute.xlu0 %961
        %v964 = vlaneseq
        %v965 = vshrl.u32 %v964, 7
        %v966 = vsub.s32 1, %v965
        %v967 = vrot.slane %v319, %v966
        %v968 = vmul.f32 %v710, %v967
        %v969 = vmul.f32 %v714, %v967
        %v970 = vmul.f32 %v718, %v967
        %v971 = vmul.f32 %v722, %v967
        %v972 = vmul.f32 %v726, %v967
        %v973 = vmul.f32 %v730, %v967
        %v974 = vmul.f32 %v734, %v967
        %v975 = vmul.f32 %v738, %v967
        %v976 = vmul.f32 %v742, %v967
        %v977 = vmul.f32 %v746, %v967
        %v978 = vmul.f32 %v750, %v967
        %v979 = vmul.f32 %v754, %v967
        %v980 = vmul.f32 %v758, %v967
        %v981 = vmul.f32 %v762, %v967
        %v982 = vmul.f32 %v766, %v967
        %v983 = vmul.f32 %v770, %v967
        %v984 = vmul.f32 %v774, %v967
        %v985 = vmul.f32 %v778, %v967
        %v986 = vmul.f32 %v782, %v967
        %v987 = vmul.f32 %v786, %v967
        %v988 = vmul.f32 %v790, %v967
        %v989 = vmul.f32 %v794, %v967
        %v990 = vmul.f32 %v798, %v967
        %v991 = vmul.f32 %v802, %v967
        %v992 = vmul.f32 %v806, %v967
        %v993 = vmul.f32 %v810, %v967
        %v994 = vmul.f32 %v814, %v967
        %v995 = vmul.f32 %v818, %v967
        %v996 = vmul.f32 %v822, %v967
        %v997 = vmul.f32 %v826, %v967
        %v998 = vmul.f32 %v830, %v967
        %v999 = vmul.f32 %v834, %v967
        %v1000 = vmul.f32 %v838, %v967
        %v1001 = vmul.f32 %v842, %v967
        %v1002 = vmul.f32 %v846, %v967
        %v1003 = vmul.f32 %v850, %v967
        %v1004 = vmul.f32 %v854, %v967
        %v1005 = vmul.f32 %v858, %v967
        %v1006 = vmul.f32 %v862, %v967
        %v1007 = vmul.f32 %v866, %v967
        %v1008 = vmul.f32 %v870, %v967
        %v1009 = vmul.f32 %v874, %v967
        %v1010 = vmul.f32 %v878, %v967
        %v1011 = vmul.f32 %v882, %v967
        %v1012 = vmul.f32 %v886, %v967
        %v1013 = vmul.f32 %v890, %v967
        %v1014 = vmul.f32 %v894, %v967
        %v1015 = vmul.f32 %v898, %v967
        %v1016 = vmul.f32 %v902, %v967
        %v1017 = vmul.f32 %v906, %v967
        %v1018 = vmul.f32 %v910, %v967
        %v1019 = vmul.f32 %v914, %v967
        %v1020 = vmul.f32 %v918, %v967
        %v1021 = vmul.f32 %v922, %v967
        %v1022 = vmul.f32 %v926, %v967
        %v1023 = vmul.f32 %v930, %v967
        %v1024 = vmul.f32 %v934, %v967
        %v1025 = vmul.f32 %v938, %v967
        %v1026 = vmul.f32 %v942, %v967
        %v1027 = vmul.f32 %v946, %v967
        %v1028 = vmul.f32 %v950, %v967
        %v1029 = vmul.f32 %v954, %v967
        %v1030 = vmul.f32 %v958, %v967
        %v1031 = vmul.f32 %v962, %v967
        %v1032 = vadd.f32 %v644, %v968
        %v1033 = vadd.f32 %v645, %v969
        %v1034 = vadd.f32 %v646, %v970
        %v1035 = vadd.f32 %v647, %v971
        %v1036 = vadd.f32 %v648, %v972
        %v1037 = vadd.f32 %v649, %v973
        %v1038 = vadd.f32 %v650, %v974
        %v1039 = vadd.f32 %v651, %v975
        %v1040 = vadd.f32 %v652, %v976
        %v1041 = vadd.f32 %v653, %v977
        %v1042 = vadd.f32 %v654, %v978
        %v1043 = vadd.f32 %v655, %v979
        %v1044 = vadd.f32 %v656, %v980
        %v1045 = vadd.f32 %v657, %v981
        %v1046 = vadd.f32 %v658, %v982
        %v1047 = vadd.f32 %v659, %v983
        %v1048 = vadd.f32 %v660, %v984
        %v1049 = vadd.f32 %v661, %v985
        %v1050 = vadd.f32 %v662, %v986
        %v1051 = vadd.f32 %v663, %v987
        %v1052 = vadd.f32 %v664, %v988
        %v1053 = vadd.f32 %v665, %v989
        %v1054 = vadd.f32 %v666, %v990
        %v1055 = vadd.f32 %v667, %v991
        %v1056 = vadd.f32 %v668, %v992
        %v1057 = vadd.f32 %v669, %v993
        %v1058 = vadd.f32 %v670, %v994
        %v1059 = vadd.f32 %v671, %v995
        %v1060 = vadd.f32 %v672, %v996
        %v1061 = vadd.f32 %v673, %v997
        %v1062 = vadd.f32 %v674, %v998
        %v1063 = vadd.f32 %v675, %v999
        %v1064 = vadd.f32 %v676, %v1000
        %v1065 = vadd.f32 %v677, %v1001
        %v1066 = vadd.f32 %v678, %v1002
        %v1067 = vadd.f32 %v679, %v1003
        %v1068 = vadd.f32 %v680, %v1004
        %v1069 = vadd.f32 %v681, %v1005
        %v1070 = vadd.f32 %v682, %v1006
        %v1071 = vadd.f32 %v683, %v1007
        %v1072 = vadd.f32 %v684, %v1008
        %v1073 = vadd.f32 %v685, %v1009
        %v1074 = vadd.f32 %v686, %v1010
        %v1075 = vadd.f32 %v687, %v1011
        %v1076 = vadd.f32 %v688, %v1012
        %v1077 = vadd.f32 %v689, %v1013
        %v1078 = vadd.f32 %v690, %v1014
        %v1079 = vadd.f32 %v691, %v1015
        %v1080 = vadd.f32 %v692, %v1016
        %v1081 = vadd.f32 %v693, %v1017
        %v1082 = vadd.f32 %v694, %v1018
        %v1083 = vadd.f32 %v695, %v1019
        %v1084 = vadd.f32 %v696, %v1020
        %v1085 = vadd.f32 %v697, %v1021
        %v1086 = vadd.f32 %v698, %v1022
        %v1087 = vadd.f32 %v699, %v1023
        %v1088 = vadd.f32 %v700, %v1024
        %v1089 = vadd.f32 %v701, %v1025
        %v1090 = vadd.f32 %v702, %v1026
        %v1091 = vadd.f32 %v703, %v1027
        %v1092 = vadd.f32 %v704, %v1028
        %v1093 = vadd.f32 %v705, %v1029
        %v1094 = vadd.f32 %v706, %v1030
        %v1095 = vadd.f32 %v707, %v1031
        %1096 = vset.pattern.permute.xlu0 2
        %1097 = vperm.xlu0 %1096, %v255
        %v1098 = vpop.permute.xlu0 %1097
        %1100 = vset.pattern.permute.xlu0 2
        %1101 = vperm.xlu0 %1100, %v256
        %v1102 = vpop.permute.xlu0 %1101
        %1104 = vset.pattern.permute.xlu0 2
        %1105 = vperm.xlu0 %1104, %v257
        %v1106 = vpop.permute.xlu0 %1105
        %1108 = vset.pattern.permute.xlu0 2
        %1109 = vperm.xlu0 %1108, %v258
        %v1110 = vpop.permute.xlu0 %1109
        %1112 = vset.pattern.permute.xlu0 2
        %1113 = vperm.xlu0 %1112, %v259
        %v1114 = vpop.permute.xlu0 %1113
        %1116 = vset.pattern.permute.xlu0 2
        %1117 = vperm.xlu0 %1116, %v260
        %v1118 = vpop.permute.xlu0 %1117
        %1120 = vset.pattern.permute.xlu0 2
        %1121 = vperm.xlu0 %1120, %v261
        %v1122 = vpop.permute.xlu0 %1121
        %1124 = vset.pattern.permute.xlu0 2
        %1125 = vperm.xlu0 %1124, %v262
        %v1126 = vpop.permute.xlu0 %1125
        %1128 = vset.pattern.permute.xlu0 2
        %1129 = vperm.xlu0 %1128, %v263
        %v1130 = vpop.permute.xlu0 %1129
        %1132 = vset.pattern.permute.xlu0 2
        %1133 = vperm.xlu0 %1132, %v264
        %v1134 = vpop.permute.xlu0 %1133
        %1136 = vset.pattern.permute.xlu0 2
        %1137 = vperm.xlu0 %1136, %v265
        %v1138 = vpop.permute.xlu0 %1137
        %1140 = vset.pattern.permute.xlu0 2
        %1141 = vperm.xlu0 %1140, %v266
        %v1142 = vpop.permute.xlu0 %1141
        %1144 = vset.pattern.permute.xlu0 2
        %1145 = vperm.xlu0 %1144, %v267
        %v1146 = vpop.permute.xlu0 %1145
        %1148 = vset.pattern.permute.xlu0 2
        %1149 = vperm.xlu0 %1148, %v268
        %v1150 = vpop.permute.xlu0 %1149
        %1152 = vset.pattern.permute.xlu0 2
        %1153 = vperm.xlu0 %1152, %v269
        %v1154 = vpop.permute.xlu0 %1153
        %1156 = vset.pattern.permute.xlu0 2
        %1157 = vperm.xlu0 %1156, %v270
        %v1158 = vpop.permute.xlu0 %1157
        %1160 = vset.pattern.permute.xlu0 2
        %1161 = vperm.xlu0 %1160, %v271
        %v1162 = vpop.permute.xlu0 %1161
        %1164 = vset.pattern.permute.xlu0 2
        %1165 = vperm.xlu0 %1164, %v272
        %v1166 = vpop.permute.xlu0 %1165
        %1168 = vset.pattern.permute.xlu0 2
        %1169 = vperm.xlu0 %1168, %v273
        %v1170 = vpop.permute.xlu0 %1169
        %1172 = vset.pattern.permute.xlu0 2
        %1173 = vperm.xlu0 %1172, %v274
        %v1174 = vpop.permute.xlu0 %1173
        %1176 = vset.pattern.permute.xlu0 2
        %1177 = vperm.xlu0 %1176, %v275
        %v1178 = vpop.permute.xlu0 %1177
        %1180 = vset.pattern.permute.xlu0 2
        %1181 = vperm.xlu0 %1180, %v276
        %v1182 = vpop.permute.xlu0 %1181
        %1184 = vset.pattern.permute.xlu0 2
        %1185 = vperm.xlu0 %1184, %v277
        %v1186 = vpop.permute.xlu0 %1185
        %1188 = vset.pattern.permute.xlu0 2
        %1189 = vperm.xlu0 %1188, %v278
        %v1190 = vpop.permute.xlu0 %1189
        %1192 = vset.pattern.permute.xlu0 2
        %1193 = vperm.xlu0 %1192, %v279
        %v1194 = vpop.permute.xlu0 %1193
        %1196 = vset.pattern.permute.xlu0 2
        %1197 = vperm.xlu0 %1196, %v280
        %v1198 = vpop.permute.xlu0 %1197
        %1200 = vset.pattern.permute.xlu0 2
        %1201 = vperm.xlu0 %1200, %v281
        %v1202 = vpop.permute.xlu0 %1201
        %1204 = vset.pattern.permute.xlu0 2
        %1205 = vperm.xlu0 %1204, %v282
        %v1206 = vpop.permute.xlu0 %1205
        %1208 = vset.pattern.permute.xlu0 2
        %1209 = vperm.xlu0 %1208, %v283
        %v1210 = vpop.permute.xlu0 %1209
        %1212 = vset.pattern.permute.xlu0 2
        %1213 = vperm.xlu0 %1212, %v284
        %v1214 = vpop.permute.xlu0 %1213
        %1216 = vset.pattern.permute.xlu0 2
        %1217 = vperm.xlu0 %1216, %v285
        %v1218 = vpop.permute.xlu0 %1217
        %1220 = vset.pattern.permute.xlu0 2
        %1221 = vperm.xlu0 %1220, %v286
        %v1222 = vpop.permute.xlu0 %1221
        %1224 = vset.pattern.permute.xlu0 2
        %1225 = vperm.xlu0 %1224, %v287
        %v1226 = vpop.permute.xlu0 %1225
        %1228 = vset.pattern.permute.xlu0 2
        %1229 = vperm.xlu0 %1228, %v288
        %v1230 = vpop.permute.xlu0 %1229
        %1232 = vset.pattern.permute.xlu0 2
        %1233 = vperm.xlu0 %1232, %v289
        %v1234 = vpop.permute.xlu0 %1233
        %1236 = vset.pattern.permute.xlu0 2
        %1237 = vperm.xlu0 %1236, %v290
        %v1238 = vpop.permute.xlu0 %1237
        %1240 = vset.pattern.permute.xlu0 2
        %1241 = vperm.xlu0 %1240, %v291
        %v1242 = vpop.permute.xlu0 %1241
        %1244 = vset.pattern.permute.xlu0 2
        %1245 = vperm.xlu0 %1244, %v292
        %v1246 = vpop.permute.xlu0 %1245
        %1248 = vset.pattern.permute.xlu0 2
        %1249 = vperm.xlu0 %1248, %v293
        %v1250 = vpop.permute.xlu0 %1249
        %1252 = vset.pattern.permute.xlu0 2
        %1253 = vperm.xlu0 %1252, %v294
        %v1254 = vpop.permute.xlu0 %1253
        %1256 = vset.pattern.permute.xlu0 2
        %1257 = vperm.xlu0 %1256, %v295
        %v1258 = vpop.permute.xlu0 %1257
        %1260 = vset.pattern.permute.xlu0 2
        %1261 = vperm.xlu0 %1260, %v296
        %v1262 = vpop.permute.xlu0 %1261
        %1264 = vset.pattern.permute.xlu0 2
        %1265 = vperm.xlu0 %1264, %v297
        %v1266 = vpop.permute.xlu0 %1265
        %1268 = vset.pattern.permute.xlu0 2
        %1269 = vperm.xlu0 %1268, %v298
        %v1270 = vpop.permute.xlu0 %1269
        %1272 = vset.pattern.permute.xlu0 2
        %1273 = vperm.xlu0 %1272, %v299
        %v1274 = vpop.permute.xlu0 %1273
        %1276 = vset.pattern.permute.xlu0 2
        %1277 = vperm.xlu0 %1276, %v300
        %v1278 = vpop.permute.xlu0 %1277
        %1280 = vset.pattern.permute.xlu0 2
        %1281 = vperm.xlu0 %1280, %v301
        %v1282 = vpop.permute.xlu0 %1281
        %1284 = vset.pattern.permute.xlu0 2
        %1285 = vperm.xlu0 %1284, %v302
        %v1286 = vpop.permute.xlu0 %1285
        %1288 = vset.pattern.permute.xlu0 2
        %1289 = vperm.xlu0 %1288, %v303
        %v1290 = vpop.permute.xlu0 %1289
        %1292 = vset.pattern.permute.xlu0 2
        %1293 = vperm.xlu0 %1292, %v304
        %v1294 = vpop.permute.xlu0 %1293
        %1296 = vset.pattern.permute.xlu0 2
        %1297 = vperm.xlu0 %1296, %v305
        %v1298 = vpop.permute.xlu0 %1297
        %1300 = vset.pattern.permute.xlu0 2
        %1301 = vperm.xlu0 %1300, %v306
        %v1302 = vpop.permute.xlu0 %1301
        %1304 = vset.pattern.permute.xlu0 2
        %1305 = vperm.xlu0 %1304, %v307
        %v1306 = vpop.permute.xlu0 %1305
        %1308 = vset.pattern.permute.xlu0 2
        %1309 = vperm.xlu0 %1308, %v308
        %v1310 = vpop.permute.xlu0 %1309
        %1312 = vset.pattern.permute.xlu0 2
        %1313 = vperm.xlu0 %1312, %v309
        %v1314 = vpop.permute.xlu0 %1313
        %1316 = vset.pattern.permute.xlu0 2
        %1317 = vperm.xlu0 %1316, %v310
        %v1318 = vpop.permute.xlu0 %1317
        %1320 = vset.pattern.permute.xlu0 2
        %1321 = vperm.xlu0 %1320, %v311
        %v1322 = vpop.permute.xlu0 %1321
        %1324 = vset.pattern.permute.xlu0 2
        %1325 = vperm.xlu0 %1324, %v312
        %v1326 = vpop.permute.xlu0 %1325
        %1328 = vset.pattern.permute.xlu0 2
        %1329 = vperm.xlu0 %1328, %v313
        %v1330 = vpop.permute.xlu0 %1329
        %1332 = vset.pattern.permute.xlu0 2
        %1333 = vperm.xlu0 %1332, %v314
        %v1334 = vpop.permute.xlu0 %1333
        %1336 = vset.pattern.permute.xlu0 2
        %1337 = vperm.xlu0 %1336, %v315
        %v1338 = vpop.permute.xlu0 %1337
        %1340 = vset.pattern.permute.xlu0 2
        %1341 = vperm.xlu0 %1340, %v316
        %v1342 = vpop.permute.xlu0 %1341
        %1344 = vset.pattern.permute.xlu0 2
        %1345 = vperm.xlu0 %1344, %v317
        %v1346 = vpop.permute.xlu0 %1345
        %1348 = vset.pattern.permute.xlu0 2
        %1349 = vperm.xlu0 %1348, %v318
        %v1350 = vpop.permute.xlu0 %1349
        %v1352 = vlaneseq
        %v1353 = vshrl.u32 %v1352, 7
        %v1354 = vsub.s32 2, %v1353
        %v1355 = vrot.slane %v319, %v1354
        %v1356 = vmul.f32 %v1098, %v1355
        %v1357 = vmul.f32 %v1102, %v1355
        %v1358 = vmul.f32 %v1106, %v1355
        %v1359 = vmul.f32 %v1110, %v1355
        %v1360 = vmul.f32 %v1114, %v1355
        %v1361 = vmul.f32 %v1118, %v1355
        %v1362 = vmul.f32 %v1122, %v1355
        %v1363 = vmul.f32 %v1126, %v1355
        %v1364 = vmul.f32 %v1130, %v1355
        %v1365 = vmul.f32 %v1134, %v1355
        %v1366 = vmul.f32 %v1138, %v1355
        %v1367 = vmul.f32 %v1142, %v1355
        %v1368 = vmul.f32 %v1146, %v1355
        %v1369 = vmul.f32 %v1150, %v1355
        %v1370 = vmul.f32 %v1154, %v1355
        %v1371 = vmul.f32 %v1158, %v1355
        %v1372 = vmul.f32 %v1162, %v1355
        %v1373 = vmul.f32 %v1166, %v1355
        %v1374 = vmul.f32 %v1170, %v1355
        %v1375 = vmul.f32 %v1174, %v1355
        %v1376 = vmul.f32 %v1178, %v1355
        %v1377 = vmul.f32 %v1182, %v1355
        %v1378 = vmul.f32 %v1186, %v1355
        %v1379 = vmul.f32 %v1190, %v1355
        %v1380 = vmul.f32 %v1194, %v1355
        %v1381 = vmul.f32 %v1198, %v1355
        %v1382 = vmul.f32 %v1202, %v1355
        %v1383 = vmul.f32 %v1206, %v1355
        %v1384 = vmul.f32 %v1210, %v1355
        %v1385 = vmul.f32 %v1214, %v1355
        %v1386 = vmul.f32 %v1218, %v1355
        %v1387 = vmul.f32 %v1222, %v1355
        %v1388 = vmul.f32 %v1226, %v1355
        %v1389 = vmul.f32 %v1230, %v1355
        %v1390 = vmul.f32 %v1234, %v1355
        %v1391 = vmul.f32 %v1238, %v1355
        %v1392 = vmul.f32 %v1242, %v1355
        %v1393 = vmul.f32 %v1246, %v1355
        %v1394 = vmul.f32 %v1250, %v1355
        %v1395 = vmul.f32 %v1254, %v1355
        %v1396 = vmul.f32 %v1258, %v1355
        %v1397 = vmul.f32 %v1262, %v1355
        %v1398 = vmul.f32 %v1266, %v1355
        %v1399 = vmul.f32 %v1270, %v1355
        %v1400 = vmul.f32 %v1274, %v1355
        %v1401 = vmul.f32 %v1278, %v1355
        %v1402 = vmul.f32 %v1282, %v1355
        %v1403 = vmul.f32 %v1286, %v1355
        %v1404 = vmul.f32 %v1290, %v1355
        %v1405 = vmul.f32 %v1294, %v1355
        %v1406 = vmul.f32 %v1298, %v1355
        %v1407 = vmul.f32 %v1302, %v1355
        %v1408 = vmul.f32 %v1306, %v1355
        %v1409 = vmul.f32 %v1310, %v1355
        %v1410 = vmul.f32 %v1314, %v1355
        %v1411 = vmul.f32 %v1318, %v1355
        %v1412 = vmul.f32 %v1322, %v1355
        %v1413 = vmul.f32 %v1326, %v1355
        %v1414 = vmul.f32 %v1330, %v1355
        %v1415 = vmul.f32 %v1334, %v1355
        %v1416 = vmul.f32 %v1338, %v1355
        %v1417 = vmul.f32 %v1342, %v1355
        %v1418 = vmul.f32 %v1346, %v1355
        %v1419 = vmul.f32 %v1350, %v1355
        %v1420 = vadd.f32 %v1032, %v1356
        %v1421 = vadd.f32 %v1033, %v1357
        %v1422 = vadd.f32 %v1034, %v1358
        %v1423 = vadd.f32 %v1035, %v1359
        %v1424 = vadd.f32 %v1036, %v1360
        %v1425 = vadd.f32 %v1037, %v1361
        %v1426 = vadd.f32 %v1038, %v1362
        %v1427 = vadd.f32 %v1039, %v1363
        %v1428 = vadd.f32 %v1040, %v1364
        %v1429 = vadd.f32 %v1041, %v1365
        %v1430 = vadd.f32 %v1042, %v1366
        %v1431 = vadd.f32 %v1043, %v1367
        %v1432 = vadd.f32 %v1044, %v1368
        %v1433 = vadd.f32 %v1045, %v1369
        %v1434 = vadd.f32 %v1046, %v1370
        %v1435 = vadd.f32 %v1047, %v1371
        %v1436 = vadd.f32 %v1048, %v1372
        %v1437 = vadd.f32 %v1049, %v1373
        %v1438 = vadd.f32 %v1050, %v1374
        %v1439 = vadd.f32 %v1051, %v1375
        %v1440 = vadd.f32 %v1052, %v1376
        %v1441 = vadd.f32 %v1053, %v1377
        %v1442 = vadd.f32 %v1054, %v1378
        %v1443 = vadd.f32 %v1055, %v1379
        %v1444 = vadd.f32 %v1056, %v1380
        %v1445 = vadd.f32 %v1057, %v1381
        %v1446 = vadd.f32 %v1058, %v1382
        %v1447 = vadd.f32 %v1059, %v1383
        %v1448 = vadd.f32 %v1060, %v1384
        %v1449 = vadd.f32 %v1061, %v1385
        %v1450 = vadd.f32 %v1062, %v1386
        %v1451 = vadd.f32 %v1063, %v1387
        %v1452 = vadd.f32 %v1064, %v1388
        %v1453 = vadd.f32 %v1065, %v1389
        %v1454 = vadd.f32 %v1066, %v1390
        %v1455 = vadd.f32 %v1067, %v1391
        %v1456 = vadd.f32 %v1068, %v1392
        %v1457 = vadd.f32 %v1069, %v1393
        %v1458 = vadd.f32 %v1070, %v1394
        %v1459 = vadd.f32 %v1071, %v1395
        %v1460 = vadd.f32 %v1072, %v1396
        %v1461 = vadd.f32 %v1073, %v1397
        %v1462 = vadd.f32 %v1074, %v1398
        %v1463 = vadd.f32 %v1075, %v1399
        %v1464 = vadd.f32 %v1076, %v1400
        %v1465 = vadd.f32 %v1077, %v1401
        %v1466 = vadd.f32 %v1078, %v1402
        %v1467 = vadd.f32 %v1079, %v1403
        %v1468 = vadd.f32 %v1080, %v1404
        %v1469 = vadd.f32 %v1081, %v1405
        %v1470 = vadd.f32 %v1082, %v1406
        %v1471 = vadd.f32 %v1083, %v1407
        %v1472 = vadd.f32 %v1084, %v1408
        %v1473 = vadd.f32 %v1085, %v1409
        %v1474 = vadd.f32 %v1086, %v1410
        %v1475 = vadd.f32 %v1087, %v1411
        %v1476 = vadd.f32 %v1088, %v1412
        %v1477 = vadd.f32 %v1089, %v1413
        %v1478 = vadd.f32 %v1090, %v1414
        %v1479 = vadd.f32 %v1091, %v1415
        %v1480 = vadd.f32 %v1092, %v1416
        %v1481 = vadd.f32 %v1093, %v1417
        %v1482 = vadd.f32 %v1094, %v1418
        %v1483 = vadd.f32 %v1095, %v1419
        %v1484 = vld [vmem:[%s2] sm:$0x1]
        %v1486 = vlaneseq
        %v1487 = vshrl.u32 %v1486, 7
        %v1488 = vsub.s32 0, %v1487
        %v1489 = vrot.slane %v1484, %v1488
        %v1491 = vadd.f32 %v1420, %v1489
        %v1492 = vadd.f32 %v1421, %v1489
        %v1493 = vadd.f32 %v1422, %v1489
        %v1494 = vadd.f32 %v1423, %v1489
        %v1495 = vadd.f32 %v1424, %v1489
        %v1496 = vadd.f32 %v1425, %v1489
        %v1497 = vadd.f32 %v1426, %v1489
        %v1498 = vadd.f32 %v1427, %v1489
        %v1499 = vadd.f32 %v1428, %v1489
        %v1500 = vadd.f32 %v1429, %v1489
        %v1501 = vadd.f32 %v1430, %v1489
        %v1502 = vadd.f32 %v1431, %v1489
        %v1503 = vadd.f32 %v1432, %v1489
        %v1504 = vadd.f32 %v1433, %v1489
        %v1505 = vadd.f32 %v1434, %v1489
        %v1506 = vadd.f32 %v1435, %v1489
        %v1507 = vadd.f32 %v1436, %v1489
        %v1508 = vadd.f32 %v1437, %v1489
        %v1509 = vadd.f32 %v1438, %v1489
        %v1510 = vadd.f32 %v1439, %v1489
        %v1511 = vadd.f32 %v1440, %v1489
        %v1512 = vadd.f32 %v1441, %v1489
        %v1513 = vadd.f32 %v1442, %v1489
        %v1514 = vadd.f32 %v1443, %v1489
        %v1515 = vadd.f32 %v1444, %v1489
        %v1516 = vadd.f32 %v1445, %v1489
        %v1517 = vadd.f32 %v1446, %v1489
        %v1518 = vadd.f32 %v1447, %v1489
        %v1519 = vadd.f32 %v1448, %v1489
        %v1520 = vadd.f32 %v1449, %v1489
        %v1521 = vadd.f32 %v1450, %v1489
        %v1522 = vadd.f32 %v1451, %v1489
        %v1523 = vadd.f32 %v1452, %v1489
        %v1524 = vadd.f32 %v1453, %v1489
        %v1525 = vadd.f32 %v1454, %v1489
        %v1526 = vadd.f32 %v1455, %v1489
        %v1527 = vadd.f32 %v1456, %v1489
        %v1528 = vadd.f32 %v1457, %v1489
        %v1529 = vadd.f32 %v1458, %v1489
        %v1530 = vadd.f32 %v1459, %v1489
        %v1531 = vadd.f32 %v1460, %v1489
        %v1532 = vadd.f32 %v1461, %v1489
        %v1533 = vadd.f32 %v1462, %v1489
        %v1534 = vadd.f32 %v1463, %v1489
        %v1535 = vadd.f32 %v1464, %v1489
        %v1536 = vadd.f32 %v1465, %v1489
        %v1537 = vadd.f32 %v1466, %v1489
        %v1538 = vadd.f32 %v1467, %v1489
        %v1539 = vadd.f32 %v1468, %v1489
        %v1540 = vadd.f32 %v1469, %v1489
        %v1541 = vadd.f32 %v1470, %v1489
        %v1542 = vadd.f32 %v1471, %v1489
        %v1543 = vadd.f32 %v1472, %v1489
        %v1544 = vadd.f32 %v1473, %v1489
        %v1545 = vadd.f32 %v1474, %v1489
        %v1546 = vadd.f32 %v1475, %v1489
        %v1547 = vadd.f32 %v1476, %v1489
        %v1548 = vadd.f32 %v1477, %v1489
        %v1549 = vadd.f32 %v1478, %v1489
        %v1550 = vadd.f32 %v1479, %v1489
        %v1551 = vadd.f32 %v1480, %v1489
        %v1552 = vadd.f32 %v1481, %v1489
        %v1553 = vadd.f32 %v1482, %v1489
        %v1554 = vadd.f32 %v1483, %v1489
        %v1555 = vmax.f32 %v1491, 0.0
        %v1556 = vmax.f32 %v1492, 0.0
        %v1557 = vmax.f32 %v1493, 0.0
        %v1558 = vmax.f32 %v1494, 0.0
        %v1559 = vmax.f32 %v1495, 0.0
        %v1560 = vmax.f32 %v1496, 0.0
        %v1561 = vmax.f32 %v1497, 0.0
        %v1562 = vmax.f32 %v1498, 0.0
        %v1563 = vmax.f32 %v1499, 0.0
        %v1564 = vmax.f32 %v1500, 0.0
        %v1565 = vmax.f32 %v1501, 0.0
        %v1566 = vmax.f32 %v1502, 0.0
        %v1567 = vmax.f32 %v1503, 0.0
        %v1568 = vmax.f32 %v1504, 0.0
        %v1569 = vmax.f32 %v1505, 0.0
        %v1570 = vmax.f32 %v1506, 0.0
        %v1571 = vmax.f32 %v1507, 0.0
        %v1572 = vmax.f32 %v1508, 0.0
        %v1573 = vmax.f32 %v1509, 0.0
        %v1574 = vmax.f32 %v1510, 0.0
        %v1575 = vmax.f32 %v1511, 0.0
        %v1576 = vmax.f32 %v1512, 0.0
        %v1577 = vmax.f32 %v1513, 0.0
        %v1578 = vmax.f32 %v1514, 0.0
        %v1579 = vmax.f32 %v1515, 0.0
        %v1580 = vmax.f32 %v1516, 0.0
        %v1581 = vmax.f32 %v1517, 0.0
        %v1582 = vmax.f32 %v1518, 0.0
        %v1583 = vmax.f32 %v1519, 0.0
        %v1584 = vmax.f32 %v1520, 0.0
        %v1585 = vmax.f32 %v1521, 0.0
        %v1586 = vmax.f32 %v1522, 0.0
        %v1587 = vmax.f32 %v1523, 0.0
        %v1588 = vmax.f32 %v1524, 0.0
        %v1589 = vmax.f32 %v1525, 0.0
        %v1590 = vmax.f32 %v1526, 0.0
        %v1591 = vmax.f32 %v1527, 0.0
        %v1592 = vmax.f32 %v1528, 0.0
        %v1593 = vmax.f32 %v1529, 0.0
        %v1594 = vmax.f32 %v1530, 0.0
        %v1595 = vmax.f32 %v1531, 0.0
        %v1596 = vmax.f32 %v1532, 0.0
        %v1597 = vmax.f32 %v1533, 0.0
        %v1598 = vmax.f32 %v1534, 0.0
        %v1599 = vmax.f32 %v1535, 0.0
        %v1600 = vmax.f32 %v1536, 0.0
        %v1601 = vmax.f32 %v1537, 0.0
        %v1602 = vmax.f32 %v1538, 0.0
        %v1603 = vmax.f32 %v1539, 0.0
        %v1604 = vmax.f32 %v1540, 0.0
        %v1605 = vmax.f32 %v1541, 0.0
        %v1606 = vmax.f32 %v1542, 0.0
        %v1607 = vmax.f32 %v1543, 0.0
        %v1608 = vmax.f32 %v1544, 0.0
        %v1609 = vmax.f32 %v1545, 0.0
        %v1610 = vmax.f32 %v1546, 0.0
        %v1611 = vmax.f32 %v1547, 0.0
        %v1612 = vmax.f32 %v1548, 0.0
        %v1613 = vmax.f32 %v1549, 0.0
        %v1614 = vmax.f32 %v1550, 0.0
        %v1615 = vmax.f32 %v1551, 0.0
        %v1616 = vmax.f32 %v1552, 0.0
        %v1617 = vmax.f32 %v1553, 0.0
        %v1618 = vmax.f32 %v1554, 0.0
        %v1619 = vld [vmem:[#allocation2] sm:$0x1]
        %v1620 = vadd.f32 %v1555, %v1556
        %v1621 = vadd.f32 %v1620, %v1557
        %v1622 = vadd.f32 %v1621, %v1558
        %v1623 = vadd.f32 %v1622, %v1559
        %v1624 = vadd.f32 %v1623, %v1560
        %v1625 = vadd.f32 %v1624, %v1561
        %v1626 = vadd.f32 %v1625, %v1562
        %v1627 = vadd.f32 %v1626, %v1563
        %v1628 = vadd.f32 %v1627, %v1564
        %v1629 = vadd.f32 %v1628, %v1565
        %v1630 = vadd.f32 %v1629, %v1566
        %v1631 = vadd.f32 %v1630, %v1567
        %v1632 = vadd.f32 %v1631, %v1568
        %v1633 = vadd.f32 %v1632, %v1569
        %v1634 = vadd.f32 %v1633, %v1570
        %v1635 = vadd.f32 %v1634, %v1571
        %v1636 = vadd.f32 %v1635, %v1572
        %v1637 = vadd.f32 %v1636, %v1573
        %v1638 = vadd.f32 %v1637, %v1574
        %v1639 = vadd.f32 %v1638, %v1575
        %v1640 = vadd.f32 %v1639, %v1576
        %v1641 = vadd.f32 %v1640, %v1577
        %v1642 = vadd.f32 %v1641, %v1578
        %v1643 = vadd.f32 %v1642, %v1579
        %v1644 = vadd.f32 %v1643, %v1580
        %v1645 = vadd.f32 %v1644, %v1581
        %v1646 = vadd.f32 %v1645, %v1582
        %v1647 = vadd.f32 %v1646, %v1583
        %v1648 = vadd.f32 %v1647, %v1584
        %v1649 = vadd.f32 %v1648, %v1585
        %v1650 = vadd.f32 %v1649, %v1586
        %v1651 = vadd.f32 %v1650, %v1587
        %v1652 = vadd.f32 %v1651, %v1588
        %v1653 = vadd.f32 %v1652, %v1589
        %v1654 = vadd.f32 %v1653, %v1590
        %v1655 = vadd.f32 %v1654, %v1591
        %v1656 = vadd.f32 %v1655, %v1592
        %v1657 = vadd.f32 %v1656, %v1593
        %v1658 = vadd.f32 %v1657, %v1594
        %v1659 = vadd.f32 %v1658, %v1595
        %v1660 = vadd.f32 %v1659, %v1596
        %v1661 = vadd.f32 %v1660, %v1597
        %v1662 = vadd.f32 %v1661, %v1598
        %v1663 = vadd.f32 %v1662, %v1599
        %v1664 = vadd.f32 %v1663, %v1600
        %v1665 = vadd.f32 %v1664, %v1601
        %v1666 = vadd.f32 %v1665, %v1602
        %v1667 = vadd.f32 %v1666, %v1603
        %v1668 = vadd.f32 %v1667, %v1604
        %v1669 = vadd.f32 %v1668, %v1605
        %v1670 = vadd.f32 %v1669, %v1606
        %v1671 = vadd.f32 %v1670, %v1607
        %v1672 = vadd.f32 %v1671, %v1608
        %v1673 = vadd.f32 %v1672, %v1609
        %v1674 = vadd.f32 %v1673, %v1610
        %v1675 = vadd.f32 %v1674, %v1611
        %v1676 = vadd.f32 %v1675, %v1612
        %v1677 = vadd.f32 %v1676, %v1613
        %v1678 = vadd.f32 %v1677, %v1614
        %v1679 = vadd.f32 %v1678, %v1615
        %v1680 = vadd.f32 %v1679, %v1616
        %v1681 = vadd.f32 %v1680, %v1617
        %v1682 = vadd.f32 %v1681, %v1618
        %v1683 = vrot.slane %v1682, 4
        %v1684 = vadd.f32 %v1682, %v1683
        %v1685 = vrot.slane %v1684, 2
        %v1686 = vadd.f32 %v1684, %v1685
        %v1687 = vrot.slane %v1686, 1
        %v1688 = vadd.f32 %v1686, %v1687
        %v1689 = vadd.f32 %v1619, %v1688
        %1690 = vst [vmem:[#allocation2] sm:$0x1] %v1689
        %p1691 = scmp.eq.s32.totalorder %s24, 1
        // Predicated region
        $region45: #{tpu_custom_call.1} parent=39 // pred_check
          %p1692 = pneg %p1691
        $region46: #{tpu_custom_call.1} parent=39 // pred_check_branch
          %1694 = sbr.rel (%p1692) target = $region48
        $region47: #{tpu_custom_call.1} parent=39 // pred_region
          %v1695 = vld [vmem:[#allocation2] sm:$0x1]
          %v1696 = vmul.f32 %v1695, 0.0009765625
          %v1697 = vld [vmem:[%s3] sm:$0xff]
          %v1698 = vld [vmem:[%s3 + $0x8] sm:$0xff]
          %v1699 = vld [vmem:[%s3 + $0x10] sm:$0xff]
          %v1700 = vld [vmem:[%s3 + $0x18] sm:$0xff]
          %v1701 = vld [vmem:[%s3 + $0x20] sm:$0xff]
          %v1702 = vld [vmem:[%s3 + $0x28] sm:$0xff]
          %v1703 = vld [vmem:[%s3 + $0x30] sm:$0xff]
          %v1704 = vld [vmem:[%s3 + $0x38] sm:$0xff]
          %v1705 = vld [vmem:[%s3 + $0x40] sm:$0xff]
          %v1706 = vld [vmem:[%s3 + $0x48] sm:$0xff]
          %v1707 = vld [vmem:[%s3 + $0x50] sm:$0xff]
          %v1708 = vld [vmem:[%s3 + $0x58] sm:$0xff]
          %v1709 = vld [vmem:[%s3 + $0x60] sm:$0xff]
          %v1710 = vld [vmem:[%s3 + $0x68] sm:$0xff]
          %v1711 = vld [vmem:[%s3 + $0x70] sm:$0xff]
          %v1712 = vld [vmem:[%s3 + $0x78] sm:$0xff]
          %v1713 = vld [vmem:[%s4] sm:$0x1]
          %1714 = vmatprep.subr.mxu0 0.0
          %1715 = vmatpush1.msra.mxu0 %v1712
          %1716 = vmatprep.subr.mxu0 0.0
          %1717 = vmatpush1.msra.mxu0 %v1711
          %1718 = vmatprep.subr.mxu0 0.0
          %1719 = vmatpush1.msra.mxu0 %v1710
          %1720 = vmatprep.subr.mxu0 0.0
          %1721 = vmatpush1.msra.mxu0 %v1709
          %1722 = vmatprep.subr.mxu0 0.0
          %1723 = vmatpush1.msra.mxu0 %v1708
          %1724 = vmatprep.subr.mxu0 0.0
          %1725 = vmatpush1.msra.mxu0 %v1707
          %1726 = vmatprep.subr.mxu0 0.0
          %1727 = vmatpush1.msra.mxu0 %v1706
          %1728 = vmatprep.subr.mxu0 0.0
          %1729 = vmatpush1.msra.mxu0 %v1705
          %1730 = vmatprep.subr.mxu0 0.0
          %1731 = vmatpush1.msra.mxu0 %v1704
          %1732 = vmatprep.subr.mxu0 0.0
          %1733 = vmatpush1.msra.mxu0 %v1703
          %1734 = vmatprep.subr.mxu0 0.0
          %1735 = vmatpush1.msra.mxu0 %v1702
          %1736 = vmatprep.subr.mxu0 0.0
          %1737 = vmatpush1.msra.mxu0 %v1701
          %1738 = vmatprep.subr.mxu0 0.0
          %1739 = vmatpush1.msra.mxu0 %v1700
          %1740 = vmatprep.subr.mxu0 0.0
          %1741 = vmatpush1.msra.mxu0 %v1699
          %1742 = vmatprep.subr.mxu0 0.0
          %1743 = vmatpush1.msra.mxu0 %v1698
          %1744 = vmatprep.subr.mxu0 0.0
          %1745 = vmatpush1.msra.mxu0 %v1697
          %1746 = vmatprep.subr.mxu0 0.0
          %1747 = vmatpush2.msra.mxu0 0.0
          %1748 = vmatprep.subr.mxu0 0.0
          %1749 = vmatpush2.msra.mxu0 0.0
          %1750 = vmatprep.subr.mxu0 0.0
          %1751 = vmatpush2.msra.mxu0 0.0
          %1752 = vmatprep.subr.mxu0 0.0
          %1753 = vmatpush2.msra.mxu0 0.0
          %1754 = vmatprep.subr.mxu0 0.0
          %1755 = vmatpush2.msra.mxu0 0.0
          %1756 = vmatprep.subr.mxu0 0.0
          %1757 = vmatpush2.msra.mxu0 0.0
          %1758 = vmatprep.subr.mxu0 0.0
          %1759 = vmatpush2.msra.mxu0 0.0
          %1760 = vmatprep.subr.mxu0 0.0
          %1761 = vmatpush2.msra.mxu0 0.0
          %1762 = vmatprep.subr.mxu0 0.0
          %1763 = vmatpush2.msra.mxu0 0.0
          %1764 = vmatprep.subr.mxu0 0.0
          %1765 = vmatpush2.msra.mxu0 0.0
          %1766 = vmatprep.subr.mxu0 0.0
          %1767 = vmatpush2.msra.mxu0 0.0
          %1768 = vmatprep.subr.mxu0 0.0
          %1769 = vmatpush2.msra.mxu0 0.0
          %1770 = vmatprep.subr.mxu0 0.0
          %1771 = vmatpush2.msra.mxu0 0.0
          %1772 = vmatprep.subr.mxu0 0.0
          %1773 = vmatpush2.msra.mxu0 0.0
          %1774 = vmatprep.subr.mxu0 0.0
          %1775 = vmatpush2.msra.mxu0 0.0
          %1776 = vmatprep.subr.mxu0 0.0
          %1777 = vmatpush2.msra.mxu0 0.0
          %1778 = vmatprep.mubr.f32.mxu0 0.0
          %1779 = vmatmul.mubr.f32.gmra.mxu0 %v1696
          %v1780 = vpop.f32.mrf.mxu0
          %v1781 = vadd.f32 %v1713, %v1780
          %v1782 = vpop.f32.mrf.mxu0
          %1783 = vdwg.mxu0
          %1784 = vst [vmem:[%s239] sm:$0x1] %v1781
        $region48: #{tpu_custom_call.1} parent=39 // pred_fallthru
          _
        %s1785 = sand.u32 %s151, 1
        %s1786 = scalar_lea.sflag [#allocation4], %s1785
        %s1787 = sand.u32 %s151, 1
        %s1788 = scalar_lea.vmem [#allocation3], %s1787
        // Predicated region
        $region49: #{tpu_custom_call.1} parent=39 // pred_check
          %p1789 = pneg %p161
        $region50: #{tpu_custom_call.1} parent=39 // pred_check_branch
          %1791 = sbr.rel (%p1789) target = $region52
        $region51: #{tpu_custom_call.1} parent=39 // pred_region
          %s1793 = ssub.s32 16, 16
          %1794 = vsyncadd %s1786, %s1793
          %s1795 = smul.addr %s23, 16
          %s1796 = scalar_lea.hbm %s5, %s1795
          %s1798 = sshll.u32 %s1788, 4
          %s1799 = int_to_ptr.vmem [resolvable:$true] %s1798
          %1801 = dma.vmem_to_hbm [thread:$0]  %s1799, 16, %s1796, %s1786
        $region52: #{tpu_custom_call.1} parent=39 // pred_fallthru
          _
      $region40: #{tpu_custom_call.1} parent=5 // pred_fallthru
        _
      %p1802 = scmp.le.s32.totalorder 2, %s14
      // Predicated region
      $region53: #{tpu_custom_call.1} parent=5 // pred_check
        %p1803 = pneg %p1802
      $region54: #{tpu_custom_call.1} parent=5 // pred_check_branch
        %1805 = sbr.rel (%p1803) target = $region56
      $region55: #{tpu_custom_call.1} parent=5 // pred_region
        %s1806 = ssub.s32 %s14, 2
        // Predicated region
        $region57: #{tpu_custom_call.1} parent=55 // pred_check
          %p1807 = pneg %p167
        $region58: #{tpu_custom_call.1} parent=55 // pred_check_branch
          %1809 = sbr.rel (%p1807) target = $region60
        $region59: #{tpu_custom_call.1} parent=55 // pred_region
          %s1810 = sand.u32 %s152, 1
          %s1811 = scalar_lea.sflag [#allocation4], %s1810
          %s1812 = sand.u32 %s152, 1
          %s1813 = scalar_lea.vmem [#allocation3], %s1812
          %1814 = dma.done %s1811, 16
        $region60: #{tpu_custom_call.1} parent=55 // pred_fallthru
          _
      $region56: #{tpu_custom_call.1} parent=5 // pred_fallthru
        _
    $region6: #{tpu_custom_call.1} parent=1 // loop_footer
      %s18 = sadd.s32 1, %s14
    $region7: #{tpu_custom_call.1} parent=1 // loop_footer_branch
      %13 = sbr.rel target = $region3
    $region8: #{tpu_custom_call.1} parent=1 // loop_exit
      _
    %1815 = vsyncpa [#allocation4], 1
    %s1816 = scalar_lea.sflag [#allocation4], 1
    %1817 = vsyncpa %s1816, 1

</llo_original>
